<compile_context>
chip_gen: v6e
topology: v6e:2x2x1
jax: 0.10.0
libtpu: 0.0.40
codegen_flags: <defaults>
</compile_context>

<pallas_src>
import functools

import jax
import jax.numpy as jnp
from jax.experimental import pallas as pl
from jax.experimental.pallas import tpu as pltpu


# ----------------------------------------------------------------------------
# Fused Pallas kernel: the ENTIRE BlockStack forward for `nb` batch elements.
# ----------------------------------------------------------------------------
def _block_stack_kernel(x_ref, w_ref, shift_ref, o_ref, xp_ref, res_ref, *,
                        num_block, connect_mode, w_index):
    # x_ref    : (nb, H, W*C)        input, packed lane-dense (last dim = 128)
    # w_ref    : (L_u, 3*WC, WC)     per-layer stacked banded weights (bf16,
    #                                BN scale folded in)
    # shift_ref: (L_u, 1, WC)        folded-BN shift (f32)
    # o_ref    : (nb, H, W*C)
    # xp_ref   : VMEM (nb*(H+2), WC) bf16 zero-row-padded activations
    # res_ref  : VMEM (M, WC)        bf16 residual / shared-source buffer
    nb, H, WC = o_ref.shape
    HP = H + 2
    M = nb * HP - 2                      # matmul M dimension

    # Zero the padded scratch once; rows 0 and nb*HP-1 are never written again
    # and interior pad rows are kept zero by the row mask on every writeback.
    @pl.when(pl.program_id(0) == 0)
    def _():
        xp_ref[...] = jnp.zeros_like(xp_ref)

    # Load the nb images into their padded slots (cast to bf16 for the MXU).
    for i in range(nb):
        xp_ref[i * HP + 1:i * HP + 1 + H, :] = x_ref[i].astype(xp_ref.dtype)

    # Row-validity mask in matmul-output space: output row r maps to padded
    # row r + 1; the two rows straddling each image boundary are junk and must
    # be masked to zero so the next layer's zero padding stays intact.
    if nb > 1:
        row = jax.lax.broadcasted_iota(jnp.int32, (M, 1), 0)
        valid = jnp.ones((M, 1), jnp.float32)
        for j in range(1, nb):
            hit = (row >= j * HP - 2) & (row <= j * HP - 1)
            valid = jnp.where(hit, 0.0, valid)
    else:
        valid = None

    if connect_mode == 'shared_source':
        res_ref[...] = xp_ref[1:M + 1, :]          # x0 (pad rows are zero)

    # TODO(synk): replace with lax.fori_loop over blocks for very deep stacks.
    for blk in range(num_block):
        if connect_mode == 'distinct_source':
            res_ref[...] = xp_ref[1:M + 1, :]      # residual = block input
        for j in range(2):                         # two conv layers per block
            lw = w_index[blk * 2 + j]
            # 3x3 conv == ONE MXU matmul: kx shift, Cin->Cout mixing and the
            # BN scale are folded into the (3*WC, WC) banded weight; the ky
            # shift is a lane-concat of three shifted sublane slices.
            lhs = jnp.concatenate(
                [xp_ref[0:M, :], xp_ref[1:M + 1, :], xp_ref[2:M + 2, :]],
                axis=1)                                           # (M, 3*WC)
            acc = jnp.dot(lhs, w_ref[lw],
                          preferred_element_type=jnp.float32)     # f32 acc
            y = jnp.maximum(acc + shift_ref[lw], 0.0)   # folded BN + ReLU
            if valid is not None:
                y = y * valid                            # re-zero pad rows
            if j == 1 and connect_mode != 'no':
                y = y + res_ref[...].astype(jnp.float32)   # residual add
            xp_ref[1:M + 1, :] = y.astype(xp_ref.dtype)

    for i in range(nb):
        o_ref[i] = xp_ref[i * HP + 1:i * HP + 1 + H, :].astype(o_ref.dtype)


# ----------------------------------------------------------------------------
# Weight folding: (3,3,Ci,Co) conv weight + BN scale -> (3*W*C, W*C) stacked
# banded matrix so that   y = concat(P[r], P[r+1], P[r+2]) @ Big
# (P = row-padded, lane-packed activation).  Done ONCE per weight on the host.
# ----------------------------------------------------------------------------
def _expand_weight(w, scale, W):
    C = w.shape[2]
    WC = W * C
    kx = jnp.arange(W)[:, None] - jnp.arange(W)[None, :] + 1      # (Win, Wout)
    keep = ((kx >= 0) & (kx <= 2)).astype(w.dtype)
    blocks = w[:, jnp.clip(kx, 0, 2)] * keep[None, :, :, None, None]
    # blocks[ky, win, wout, ci, co] -> Big[ky, win*C+ci, wout*C+co]
    big = blocks.transpose(0, 1, 3, 2, 4).reshape(3, WC, WC)
    big = big * jnp.tile(scale, W)[None, None, :]     # fold BN scale into co
    return big.reshape(3 * WC, WC)                    # stack ky along K


# ----------------------------------------------------------------------------
# BlockStack forward (one fused pallas_call for the whole stack)
# ----------------------------------------------------------------------------
def block_stack_forward(x, params, connect_mode, share_weight=False):
    if connect_mode not in ('no', 'distinct_source', 'shared_source'):
        raise ValueError('"connect_mode" error!')

    N, H, W, C = x.shape
    WC = W * C
    assert WC == 128, "kernel specialized to W*C == 128 (one lane tile)"

    num_block = len(params)
    unique_blocks = params[:1] if share_weight else params
    layers = [layer for block in unique_blocks for layer in block]
    L_u = len(layers)                       # unique conv layers uploaded
    L = 2 * num_block                       # executed conv layers
    w_index = tuple((blk * 2 + j) % L_u
                    for blk in range(num_block) for j in range(2))

    big_w = jnp.stack([
        _expand_weight(l['w'].astype(jnp.float32),
                       l['scale'].astype(jnp.float32), W)
        for l in layers]).astype(jnp.bfloat16)            # (L_u, 3*WC, WC)
    shift = jnp.stack([jnp.tile(l['shift'].astype(jnp.float32), W)
                       for l in layers]).reshape(L_u, 1, WC)
    x_packed = x.reshape(N, H, WC)   # contiguous reshape: layout plumbing only

    # Batch several images into the matmul M dimension (target M ~ 256 rows).
    HP = H + 2
    nb_target = max(1, 256 // HP)
    nb = max(d for d in range(1, N + 1) if N % d == 0 and d <= nb_target)
    M = nb * HP - 2

    flops = int((N // nb) * L * (2 * M * (3 * WC) * WC + 4 * M * WC))
    bytes_accessed = int(x_packed.size * 4 + big_w.size * 2 + shift.size * 4
                         + N * H * WC * 4)

    kernel = functools.partial(_block_stack_kernel,
                               num_block=num_block,
                               connect_mode=connect_mode,
                               w_index=w_index)

    out = pl.pallas_call(
        kernel,
        out_shape=jax.ShapeDtypeStruct((N, H, WC), x.dtype),
        grid_spec=pltpu.PrefetchScalarGridSpec(
            num_scalar_prefetch=0,
            grid=(N // nb,),
            in_specs=[
                pl.BlockSpec((nb, H, WC), lambda n: (n, 0, 0)),
                pl.BlockSpec((L_u, 3 * WC, WC), lambda n: (0, 0, 0)),
                pl.BlockSpec((L_u, 1, WC), lambda n: (0, 0, 0)),
            ],
            out_specs=pl.BlockSpec((nb, H, WC), lambda n: (n, 0, 0)),
            scratch_shapes=[
                pltpu.VMEM((nb * HP, WC), jnp.bfloat16),  # padded activations
                pltpu.VMEM((M, WC), jnp.bfloat16),        # residual / x0
            ],
        ),
        compiler_params=pltpu.CompilerParams(
            dimension_semantics=("parallel",)),
        cost_estimate=pl.CostEstimate(flops=flops, transcendentals=0,
                                      bytes_accessed=bytes_accessed),
    )(x_packed, big_w, shift)

    return out.reshape(N, H, W, C)


# ----------------------------------------------------------------------------
# Parameter construction (deterministic, matches module __init__ shapes)
# ----------------------------------------------------------------------------
def _fold_bn(conv_bias, gamma, beta, mean, var, eps=1e-5):
    scale = gamma / jnp.sqrt(var + eps)
    shift = (conv_bias - mean) * scale + beta
    return scale, shift


def make_params(key, channels, num_block, share_weight):
    """One block = two conv_bn_activation layers; list of blocks, each a list
    of two dicts {'w' (3,3,Ci,Co), 'scale' (C,), 'shift' (C,)}."""
    def make_layer(k):
        kw, kb, kg, kbeta, km, kv = jax.random.split(k, 6)
        fan_in = channels * 9
        w = jax.random.normal(kw, (3, 3, channels, channels),
                              jnp.float32) * (1.0 / jnp.sqrt(fan_in))
        b = jax.random.normal(kb, (channels,), jnp.float32) * 0.01
        gamma = 1.0 + 0.1 * jax.random.normal(kg, (channels,), jnp.float32)
        beta = 0.1 * jax.random.normal(kbeta, (channels,), jnp.float32)
        mean = 0.1 * jax.random.normal(km, (channels,), jnp.float32)
        var = jnp.abs(1.0 + 0.1 * jax.random.normal(kv, (channels,),
                                                    jnp.float32))
        scale, shift = _fold_bn(b, gamma, beta, mean, var)
        return {'w': w, 'scale': scale, 'shift': shift}

    def make_block(k):
        k1, k2 = jax.random.split(k)
        return [make_layer(k1), make_layer(k2)]

    if share_weight:
        block = make_block(key)
        return [block for _ in range(num_block)]
    keys = jax.random.split(key, num_block)
    return [make_block(keys[i]) for i in range(num_block)]


# ----------------------------------------------------------------------------
# Reference (pure JAX, f32) for a sanity check of the fused kernel
# ----------------------------------------------------------------------------
# TODO(synk): BatchNorm is applied in eval-mode (running stats folded to a
# per-channel affine); training-mode batch statistics are not reproduced.
def _conv_bn_relu_ref(x, w, scale, shift):
    y = jax.lax.conv_general_dilated(
        x, w, window_strides=(1, 1), padding='SAME',
        dimension_numbers=('NHWC', 'HWIO', 'NHWC'),
        precision=jax.lax.Precision.HIGHEST)
    y = y * scale + shift
    return jnp.maximum(y, 0.0)


def block_stack_ref(x, params, connect_mode):
    def apply_block(x, block):
        for layer in block:
            x = _conv_bn_relu_ref(x, layer['w'], layer['scale'],
                                  layer['shift'])
        return x

    if connect_mode == 'no':
        for block in params:
            x = apply_block(x, block)
    elif connect_mode == 'distinct_source':
        for block in params:
            x = apply_block(x, block) + x
    elif connect_mode == 'shared_source':
        x0 = x
        for block in params:
            x = apply_block(x, block) + x0
    return x


if __name__ == "__main__":
    # Small shapes: batch=2, channels=8, spatial=16x16, num_block=2.
    N, H, W, C = 2, 16, 16, 8
    num_block = 2

    key = jax.random.PRNGKey(0)
    k_x, k_p = jax.random.split(key)
    x = jax.random.normal(k_x, (N, H, W, C), jnp.float32)

    for share_weight, connect_mode in [(False, 'distinct_source'),
                                       (True, 'shared_source')]:
        params = make_params(k_p, C, num_block, share_weight)
        fwd = jax.jit(functools.partial(block_stack_forward,
                                        connect_mode=connect_mode,
                                        share_weight=share_weight))
        out = jax.block_until_ready(fwd(x, params))
        ref = block_stack_ref(x, params, connect_mode)
        assert out.shape == (N, H, W, C)
        max_err = float(jnp.max(jnp.abs(out - ref)))
        # bf16 MXU operands -> loosened tolerance vs the f32 reference.
        assert jnp.allclose(out, ref, atol=1e-1, rtol=1e-1), (connect_mode,
                                                              max_err)

    print("KERNEL_OK")
</pallas_src>

<mosaic_0001>
module attributes {stable_mosaic.version = 11 : i64} {
  func.func @_block_stack_kernel(%arg0: i32, %arg1: memref<2x16x128xf32, #tpu.memory_space<vmem>>, %arg2: memref<4x384x128xbf16, #tpu.memory_space<vmem>>, %arg3: memref<4x1x128xf32, #tpu.memory_space<vmem>>, %arg4: memref<2x16x128xf32, #tpu.memory_space<vmem>>, %arg5: memref<36x128xbf16, #tpu.memory_space<vmem>>, %arg6: memref<34x128xbf16, #tpu.memory_space<vmem>>) attributes {dimension_semantics = [#tpu.dimension_semantics<parallel>], iteration_bounds = array<i64: 1>, scalar_prefetch = 0 : i64, scratch_operands = 2 : i64, tpu.core_type = #tpu.core_type<tc>, window_params = [{transform_indices = @transform_0, window_bounds = array<i64: 2, 16, 128>}, {pipeline_mode = #tpu.pipeline_mode<synchronous>, transform_indices = @transform_1, window_bounds = array<i64: 4, 384, 128>}, {pipeline_mode = #tpu.pipeline_mode<synchronous>, transform_indices = @transform_2, window_bounds = array<i64: 4, 1, 128>}, {transform_indices = @transform_3, window_bounds = array<i64: 2, 16, 128>}]} {
    %c0_i32 = arith.constant 0 : i32
    %0 = arith.cmpi eq, %arg0, %c0_i32 : i32
    %1 = arith.extui %0 : i1 to i32
    %c0_i32_0 = arith.constant 0 : i32
    %2 = arith.cmpi ne, %1, %c0_i32_0 : i32
    scf.if %2 {
      %cst_93 = arith.constant 0.000000e+00 : bf16
      %108 = vector.broadcast %cst_93 : bf16 to vector<36x128xbf16>
      %c0_94 = arith.constant 0 : index
      %c0_95 = arith.constant 0 : index
      %109 = vector.load %arg5[%c0_94, %c0_95] : memref<36x128xbf16, #tpu.memory_space<vmem>>, vector<36x128xbf16>
      tpu.vector_store %arg5[%c0_94, %c0_95], %108 {strides = array<i32>} : memref<36x128xbf16, #tpu.memory_space<vmem>>, vector<36x128xbf16>,
    } else {
    }
    %c0 = arith.constant 0 : index
    %c0_1 = arith.constant 0 : index
    %c0_2 = arith.constant 0 : index
    %3 = vector.load %arg1[%c0, %c0_1, %c0_2] : memref<2x16x128xf32, #tpu.memory_space<vmem>>, vector<1x16x128xf32>
    %4 = vector.shape_cast %3 : vector<1x16x128xf32> to vector<16x128xf32>
    %5 = arith.truncf %4 : vector<16x128xf32> to vector<16x128xbf16>
    %c1 = arith.constant 1 : index
    %c0_3 = arith.constant 0 : index
    %6 = vector.load %arg5[%c1, %c0_3] : memref<36x128xbf16, #tpu.memory_space<vmem>>, vector<16x128xbf16>
    tpu.vector_store %arg5[%c1, %c0_3], %5 {strides = array<i32>} : memref<36x128xbf16, #tpu.memory_space<vmem>>, vector<16x128xbf16>,
    %c1_4 = arith.constant 1 : index
    %c0_5 = arith.constant 0 : index
    %c0_6 = arith.constant 0 : index
    %7 = vector.load %arg1[%c1_4, %c0_5, %c0_6] : memref<2x16x128xf32, #tpu.memory_space<vmem>>, vector<1x16x128xf32>
    %8 = vector.shape_cast %7 : vector<1x16x128xf32> to vector<16x128xf32>
    %9 = arith.truncf %8 : vector<16x128xf32> to vector<16x128xbf16>
    %c19 = arith.constant 19 : index
    %c0_7 = arith.constant 0 : index
    %10 = vector.load %arg5[%c19, %c0_7] : memref<36x128xbf16, #tpu.memory_space<vmem>>, vector<16x128xbf16>
    tpu.vector_store %arg5[%c19, %c0_7], %9 {strides = array<i32>} : memref<36x128xbf16, #tpu.memory_space<vmem>>, vector<16x128xbf16>,
    %11 = tpu.iota {dimensions = array<i32: 0>} : vector<34x1xi32>
    %cst = arith.constant 1.000000e+00 : f32
    %12 = vector.broadcast %cst : f32 to vector<34x1xf32>
    %c16_i32 = arith.constant 16 : i32
    %13 = vector.broadcast %c16_i32 : i32 to vector<34x1xi32>
    %14 = arith.cmpi sge, %11, %13 : vector<34x1xi32>
    %c17_i32 = arith.constant 17 : i32
    %15 = vector.broadcast %c17_i32 : i32 to vector<34x1xi32>
    %16 = arith.cmpi sle, %11, %15 : vector<34x1xi32>
    %17 = arith.andi %14, %16 : vector<34x1xi1>
    %cst_8 = arith.constant 0.000000e+00 : f32
    %18 = vector.broadcast %cst_8 : f32 to vector<34x1xf32>
    %19 = arith.select %17, %18, %12 : vector<34x1xi1>, vector<34x1xf32>
    %c1_9 = arith.constant 1 : index
    %c0_10 = arith.constant 0 : index
    %20 = vector.load %arg5[%c1_9, %c0_10] : memref<36x128xbf16, #tpu.memory_space<vmem>>, vector<34x128xbf16>
    %c0_11 = arith.constant 0 : index
    %c0_12 = arith.constant 0 : index
    %21 = vector.load %arg6[%c0_11, %c0_12] : memref<34x128xbf16, #tpu.memory_space<vmem>>, vector<34x128xbf16>
    tpu.vector_store %arg6[%c0_11, %c0_12], %20 {strides = array<i32>} : memref<34x128xbf16, #tpu.memory_space<vmem>>, vector<34x128xbf16>,
    %c0_13 = arith.constant 0 : index
    %c0_14 = arith.constant 0 : index
    %22 = vector.load %arg5[%c0_13, %c0_14] : memref<36x128xbf16, #tpu.memory_space<vmem>>, vector<34x128xbf16>
    %c1_15 = arith.constant 1 : index
    %c0_16 = arith.constant 0 : index
    %23 = vector.load %arg5[%c1_15, %c0_16] : memref<36x128xbf16, #tpu.memory_space<vmem>>, vector<34x128xbf16>
    %c2 = arith.constant 2 : index
    %c0_17 = arith.constant 0 : index
    %24 = vector.load %arg5[%c2, %c0_17] : memref<36x128xbf16, #tpu.memory_space<vmem>>, vector<34x128xbf16>
    %25 = tpu.concatenate %22, %23, %24 in 1 : vector<34x128xbf16>, vector<34x128xbf16>, vector<34x128xbf16> -> vector<34x384xbf16>
    %c0_18 = arith.constant 0 : index
    %c0_19 = arith.constant 0 : index
    %c0_20 = arith.constant 0 : index
    %26 = vector.load %arg2[%c0_18, %c0_19, %c0_20] : memref<4x384x128xbf16, #tpu.memory_space<vmem>>, vector<1x384x128xbf16>
    %27 = vector.shape_cast %26 : vector<1x384x128xbf16> to vector<384x128xbf16>
    %cst_21 = arith.constant dense<0.000000e+00> : vector<34x128xf32>
    %28 = tpu.matmul %25, %27, %cst_21 {dimension_numbers = #tpu.dot_dimension_numbers<[1], [0], [0], [1], [0, 0, 1, 1], [], []>} : vector<34x384xbf16>, vector<384x128xbf16>, vector<34x128xf32> -> vector<34x128xf32>
    %c0_22 = arith.constant 0 : index
    %c0_23 = arith.constant 0 : index
    %c0_24 = arith.constant 0 : index
    %29 = vector.load %arg3[%c0_22, %c0_23, %c0_24] : memref<4x1x128xf32, #tpu.memory_space<vmem>>, vector<1x1x128xf32>
    %30 = vector.shape_cast %29 : vector<1x1x128xf32> to vector<1x128xf32>
    %31 = vector.broadcast %30 : vector<1x128xf32> to vector<34x128xf32>
    %32 = arith.addf %28, %31 : vector<34x128xf32>
    %cst_25 = arith.constant 0.000000e+00 : f32
    %33 = vector.broadcast %cst_25 : f32 to vector<34x128xf32>
    %34 = arith.maximumf %32, %33 : vector<34x128xf32>
    %35 = vector.broadcast %19 : vector<34x1xf32> to vector<34x128xf32>
    %36 = arith.mulf %34, %35 : vector<34x128xf32>
    %37 = arith.truncf %36 : vector<34x128xf32> to vector<34x128xbf16>
    %c1_26 = arith.constant 1 : index
    %c0_27 = arith.constant 0 : index
    %38 = vector.load %arg5[%c1_26, %c0_27] : memref<36x128xbf16, #tpu.memory_space<vmem>>, vector<34x128xbf16>
    tpu.vector_store %arg5[%c1_26, %c0_27], %37 {strides = array<i32>} : memref<36x128xbf16, #tpu.memory_space<vmem>>, vector<34x128xbf16>,
    %c0_28 = arith.constant 0 : index
    %c0_29 = arith.constant 0 : index
    %39 = vector.load %arg5[%c0_28, %c0_29] : memref<36x128xbf16, #tpu.memory_space<vmem>>, vector<34x128xbf16>
    %c1_30 = arith.constant 1 : index
    %c0_31 = arith.constant 0 : index
    %40 = vector.load %arg5[%c1_30, %c0_31] : memref<36x128xbf16, #tpu.memory_space<vmem>>, vector<34x128xbf16>
    %c2_32 = arith.constant 2 : index
    %c0_33 = arith.constant 0 : index
    %41 = vector.load %arg5[%c2_32, %c0_33] : memref<36x128xbf16, #tpu.memory_space<vmem>>, vector<34x128xbf16>
    %42 = tpu.concatenate %39, %40, %41 in 1 : vector<34x128xbf16>, vector<34x128xbf16>, vector<34x128xbf16> -> vector<34x384xbf16>
    %c1_34 = arith.constant 1 : index
    %c0_35 = arith.constant 0 : index
    %c0_36 = arith.constant 0 : index
    %43 = vector.load %arg2[%c1_34, %c0_35, %c0_36] : memref<4x384x128xbf16, #tpu.memory_space<vmem>>, vector<1x384x128xbf16>
    %44 = vector.shape_cast %43 : vector<1x384x128xbf16> to vector<384x128xbf16>
    %cst_37 = arith.constant dense<0.000000e+00> : vector<34x128xf32>
    %45 = tpu.matmul %42, %44, %cst_37 {dimension_numbers = #tpu.dot_dimension_numbers<[1], [0], [0], [1], [0, 0, 1, 1], [], []>} : vector<34x384xbf16>, vector<384x128xbf16>, vector<34x128xf32> -> vector<34x128xf32>
    %c1_38 = arith.constant 1 : index
    %c0_39 = arith.constant 0 : index
    %c0_40 = arith.constant 0 : index
    %46 = vector.load %arg3[%c1_38, %c0_39, %c0_40] : memref<4x1x128xf32, #tpu.memory_space<vmem>>, vector<1x1x128xf32>
    %47 = vector.shape_cast %46 : vector<1x1x128xf32> to vector<1x128xf32>
    %48 = vector.broadcast %47 : vector<1x128xf32> to vector<34x128xf32>
    %49 = arith.addf %45, %48 : vector<34x128xf32>
    %cst_41 = arith.constant 0.000000e+00 : f32
    %50 = vector.broadcast %cst_41 : f32 to vector<34x128xf32>
    %51 = arith.maximumf %49, %50 : vector<34x128xf32>
    %52 = vector.broadcast %19 : vector<34x1xf32> to vector<34x128xf32>
    %53 = arith.mulf %51, %52 : vector<34x128xf32>
    %c0_42 = arith.constant 0 : index
    %c0_43 = arith.constant 0 : index
    %54 = vector.load %arg6[%c0_42, %c0_43] : memref<34x128xbf16, #tpu.memory_space<vmem>>, vector<34x128xbf16>
    %55 = arith.extf %54 : vector<34x128xbf16> to vector<34x128xf32>
    %56 = arith.addf %53, %55 : vector<34x128xf32>
    %57 = arith.truncf %56 : vector<34x128xf32> to vector<34x128xbf16>
    %c1_44 = arith.constant 1 : index
    %c0_45 = arith.constant 0 : index
    %58 = vector.load %arg5[%c1_44, %c0_45] : memref<36x128xbf16, #tpu.memory_space<vmem>>, vector<34x128xbf16>
    tpu.vector_store %arg5[%c1_44, %c0_45], %57 {strides = array<i32>} : memref<36x128xbf16, #tpu.memory_space<vmem>>, vector<34x128xbf16>,
    %c1_46 = arith.constant 1 : index
    %c0_47 = arith.constant 0 : index
    %59 = vector.load %arg5[%c1_46, %c0_47] : memref<36x128xbf16, #tpu.memory_space<vmem>>, vector<34x128xbf16>
    %c0_48 = arith.constant 0 : index
    %c0_49 = arith.constant 0 : index
    %60 = vector.load %arg6[%c0_48, %c0_49] : memref<34x128xbf16, #tpu.memory_space<vmem>>, vector<34x128xbf16>
    tpu.vector_store %arg6[%c0_48, %c0_49], %59 {strides = array<i32>} : memref<34x128xbf16, #tpu.memory_space<vmem>>, vector<34x128xbf16>,
    %c0_50 = arith.constant 0 : index
    %c0_51 = arith.constant 0 : index
    %61 = vector.load %arg5[%c0_50, %c0_51] : memref<36x128xbf16, #tpu.memory_space<vmem>>, vector<34x128xbf16>
    %c1_52 = arith.constant 1 : index
    %c0_53 = arith.constant 0 : index
    %62 = vector.load %arg5[%c1_52, %c0_53] : memref<36x128xbf16, #tpu.memory_space<vmem>>, vector<34x128xbf16>
    %c2_54 = arith.constant 2 : index
    %c0_55 = arith.constant 0 : index
    %63 = vector.load %arg5[%c2_54, %c0_55] : memref<36x128xbf16, #tpu.memory_space<vmem>>, vector<34x128xbf16>
    %64 = tpu.concatenate %61, %62, %63 in 1 : vector<34x128xbf16>, vector<34x128xbf16>, vector<34x128xbf16> -> vector<34x384xbf16>
    %c2_56 = arith.constant 2 : index
    %c0_57 = arith.constant 0 : index
    %c0_58 = arith.constant 0 : index
    %65 = vector.load %arg2[%c2_56, %c0_57, %c0_58] : memref<4x384x128xbf16, #tpu.memory_space<vmem>>, vector<1x384x128xbf16>
    %66 = vector.shape_cast %65 : vector<1x384x128xbf16> to vector<384x128xbf16>
    %cst_59 = arith.constant dense<0.000000e+00> : vector<34x128xf32>
    %67 = tpu.matmul %64, %66, %cst_59 {dimension_numbers = #tpu.dot_dimension_numbers<[1], [0], [0], [1], [0, 0, 1, 1], [], []>} : vector<34x384xbf16>, vector<384x128xbf16>, vector<34x128xf32> -> vector<34x128xf32>
    %c2_60 = arith.constant 2 : index
    %c0_61 = arith.constant 0 : index
    %c0_62 = arith.constant 0 : index
    %68 = vector.load %arg3[%c2_60, %c0_61, %c0_62] : memref<4x1x128xf32, #tpu.memory_space<vmem>>, vector<1x1x128xf32>
    %69 = vector.shape_cast %68 : vector<1x1x128xf32> to vector<1x128xf32>
    %70 = vector.broadcast %69 : vector<1x128xf32> to vector<34x128xf32>
    %71 = arith.addf %67, %70 : vector<34x128xf32>
    %cst_63 = arith.constant 0.000000e+00 : f32
    %72 = vector.broadcast %cst_63 : f32 to vector<34x128xf32>
    %73 = arith.maximumf %71, %72 : vector<34x128xf32>
    %74 = vector.broadcast %19 : vector<34x1xf32> to vector<34x128xf32>
    %75 = arith.mulf %73, %74 : vector<34x128xf32>
    %76 = arith.truncf %75 : vector<34x128xf32> to vector<34x128xbf16>
    %c1_64 = arith.constant 1 : index
    %c0_65 = arith.constant 0 : index
    %77 = vector.load %arg5[%c1_64, %c0_65] : memref<36x128xbf16, #tpu.memory_space<vmem>>, vector<34x128xbf16>
    tpu.vector_store %arg5[%c1_64, %c0_65], %76 {strides = array<i32>} : memref<36x128xbf16, #tpu.memory_space<vmem>>, vector<34x128xbf16>,
    %c0_66 = arith.constant 0 : index
    %c0_67 = arith.constant 0 : index
    %78 = vector.load %arg5[%c0_66, %c0_67] : memref<36x128xbf16, #tpu.memory_space<vmem>>, vector<34x128xbf16>
    %c1_68 = arith.constant 1 : index
    %c0_69 = arith.constant 0 : index
    %79 = vector.load %arg5[%c1_68, %c0_69] : memref<36x128xbf16, #tpu.memory_space<vmem>>, vector<34x128xbf16>
    %c2_70 = arith.constant 2 : index
    %c0_71 = arith.constant 0 : index
    %80 = vector.load %arg5[%c2_70, %c0_71] : memref<36x128xbf16, #tpu.memory_space<vmem>>, vector<34x128xbf16>
    %81 = tpu.concatenate %78, %79, %80 in 1 : vector<34x128xbf16>, vector<34x128xbf16>, vector<34x128xbf16> -> vector<34x384xbf16>
    %c3 = arith.constant 3 : index
    %c0_72 = arith.constant 0 : index
    %c0_73 = arith.constant 0 : index
    %82 = vector.load %arg2[%c3, %c0_72, %c0_73] : memref<4x384x128xbf16, #tpu.memory_space<vmem>>, vector<1x384x128xbf16>
    %83 = vector.shape_cast %82 : vector<1x384x128xbf16> to vector<384x128xbf16>
    %cst_74 = arith.constant dense<0.000000e+00> : vector<34x128xf32>
    %84 = tpu.matmul %81, %83, %cst_74 {dimension_numbers = #tpu.dot_dimension_numbers<[1], [0], [0], [1], [0, 0, 1, 1], [], []>} : vector<34x384xbf16>, vector<384x128xbf16>, vector<34x128xf32> -> vector<34x128xf32>
    %c3_75 = arith.constant 3 : index
    %c0_76 = arith.constant 0 : index
    %c0_77 = arith.constant 0 : index
    %85 = vector.load %arg3[%c3_75, %c0_76, %c0_77] : memref<4x1x128xf32, #tpu.memory_space<vmem>>, vector<1x1x128xf32>
    %86 = vector.shape_cast %85 : vector<1x1x128xf32> to vector<1x128xf32>
    %87 = vector.broadcast %86 : vector<1x128xf32> to vector<34x128xf32>
    %88 = arith.addf %84, %87 : vector<34x128xf32>
    %cst_78 = arith.constant 0.000000e+00 : f32
    %89 = vector.broadcast %cst_78 : f32 to vector<34x128xf32>
    %90 = arith.maximumf %88, %89 : vector<34x128xf32>
    %91 = vector.broadcast %19 : vector<34x1xf32> to vector<34x128xf32>
    %92 = arith.mulf %90, %91 : vector<34x128xf32>
    %c0_79 = arith.constant 0 : index
    %c0_80 = arith.constant 0 : index
    %93 = vector.load %arg6[%c0_79, %c0_80] : memref<34x128xbf16, #tpu.memory_space<vmem>>, vector<34x128xbf16>
    %94 = arith.extf %93 : vector<34x128xbf16> to vector<34x128xf32>
    %95 = arith.addf %92, %94 : vector<34x128xf32>
    %96 = arith.truncf %95 : vector<34x128xf32> to vector<34x128xbf16>
    %c1_81 = arith.constant 1 : index
    %c0_82 = arith.constant 0 : index
    %97 = vector.load %arg5[%c1_81, %c0_82] : memref<36x128xbf16, #tpu.memory_space<vmem>>, vector<34x128xbf16>
    tpu.vector_store %arg5[%c1_81, %c0_82], %96 {strides = array<i32>} : memref<36x128xbf16, #tpu.memory_space<vmem>>, vector<34x128xbf16>,
    %c1_83 = arith.constant 1 : index
    %c0_84 = arith.constant 0 : index
    %98 = vector.load %arg5[%c1_83, %c0_84] : memref<36x128xbf16, #tpu.memory_space<vmem>>, vector<16x128xbf16>
    %99 = arith.extf %98 : vector<16x128xbf16> to vector<16x128xf32>
    %c0_85 = arith.constant 0 : index
    %c0_86 = arith.constant 0 : index
    %c0_87 = arith.constant 0 : index
    %100 = vector.load %arg4[%c0_85, %c0_86, %c0_87] : memref<2x16x128xf32, #tpu.memory_space<vmem>>, vector<1x16x128xf32>
    %101 = vector.shape_cast %100 : vector<1x16x128xf32> to vector<16x128xf32>
    %102 = vector.shape_cast %99 : vector<16x128xf32> to vector<1x16x128xf32>
    tpu.vector_store %arg4[%c0_85, %c0_86, %c0_87], %102 {strides = array<i32>} : memref<2x16x128xf32, #tpu.memory_space<vmem>>, vector<1x16x128xf32>,
    %c19_88 = arith.constant 19 : index
    %c0_89 = arith.constant 0 : index
    %103 = vector.load %arg5[%c19_88, %c0_89] : memref<36x128xbf16, #tpu.memory_space<vmem>>, vector<16x128xbf16>
    %104 = arith.extf %103 : vector<16x128xbf16> to vector<16x128xf32>
    %c1_90 = arith.constant 1 : index
    %c0_91 = arith.constant 0 : index
    %c0_92 = arith.constant 0 : index
    %105 = vector.load %arg4[%c1_90, %c0_91, %c0_92] : memref<2x16x128xf32, #tpu.memory_space<vmem>>, vector<1x16x128xf32>
    %106 = vector.shape_cast %105 : vector<1x16x128xf32> to vector<16x128xf32>
    %107 = vector.shape_cast %104 : vector<16x128xf32> to vector<1x16x128xf32>
    tpu.vector_store %arg4[%c1_90, %c0_91, %c0_92], %107 {strides = array<i32>} : memref<2x16x128xf32, #tpu.memory_space<vmem>>, vector<1x16x128xf32>,
    return
  }
  func.func @transform_0(%arg0: i32) -> (i32, i32, i32) {
    %c0_i32 = arith.constant 0 : i32
    %c0_i32_0 = arith.constant 0 : i32
    %c0_i32_1 = arith.constant 0 : i32
    return %arg0, %c0_i32, %c0_i32_0 : i32, i32, i32
  }
  func.func @transform_1(%arg0: i32) -> (i32, i32, i32) {
    %c0_i32 = arith.constant 0 : i32
    %c0_i32_0 = arith.constant 0 : i32
    %c0_i32_1 = arith.constant 0 : i32
    %c0_i32_2 = arith.constant 0 : i32
    return %c0_i32, %c0_i32_0, %c0_i32_1 : i32, i32, i32
  }
  func.func @transform_2(%arg0: i32) -> (i32, i32, i32) {
    %c0_i32 = arith.constant 0 : i32
    %c0_i32_0 = arith.constant 0 : i32
    %c0_i32_1 = arith.constant 0 : i32
    %c0_i32_2 = arith.constant 0 : i32
    return %c0_i32, %c0_i32_0, %c0_i32_1 : i32, i32, i32
  }
  func.func @transform_3(%arg0: i32) -> (i32, i32, i32) {
    %c0_i32 = arith.constant 0 : i32
    %c0_i32_0 = arith.constant 0 : i32
    %c0_i32_1 = arith.constant 0 : i32
    return %arg0, %c0_i32, %c0_i32_0 : i32, i32, i32
  }
}

</mosaic_0001>

<llo_original>
// kernel: tile.43
$region0: #{tile.43}
  #allocation0 [shape = 's32[1]{0}', space=sflag, size = 0x4, scoped, tag = 'scoped memory for tile.43']
  %s0 = inlined_call_operand.vmem [shape: f32[8], index: 0, kind: input, shape index: {}]
  %s1 = inlined_call_operand.vmem [shape: f32[16,8], index: 1, kind: output, shape index: {}]
  // Predicated region
  $region2: #{tile.43} parent=0 // pred_check
    _
  $region3: #{tile.43} parent=0 // pred_check_branch
    %3 = sbr.rel (0) target = $region5
  $region4: #{tile.43} parent=0 // pred_region
    _
  $region5: #{tile.43} parent=0 // pred_fallthru
    _
  %v4 = vld [vmem:[%s0] ss:$0 sm:$0xff]
  %5 = vst [vmem:[%s1] sm:$0xff] %v4
  %s6 = scalar_lea.vmem %s1, 8
  %7 = vst [vmem:[%s6] sm:$0xff] %v4

// kernel: tile.76
$region0: #{tile.76}
  %s0 = inlined_call_operand.vmem [shape: f32[16,8], index: 0, kind: input, shape index: {}]
  %s1 = inlined_call_operand.vmem [shape: f32[1,128], index: 1, kind: output, shape index: {}]
  $region1: #{tile.76} parent=0
    #allocation0 [shape = 'u8[4096]{0}', space=vmem, size = 0x1000, scoped, tag = 'scoped mem for output reshape']
    %v2 = vld [vmem:[%s0] sm:$0x1]
    %vm3 = vcmask 64512
    %4 = vst.msk [vmem:[#allocation0] sm:$0x1] %vm3, %v2
    %s5 = scalar_lea.vmem %s0, 15
    %v6 = vld [vmem:[%s5] sm:$0x1]
    %7 = vrot.lane.b32.xlu0 %v6, 120
    %v8 = vpop.permute.xlu0 %7
    %vm9 = vcmask 1048512
    %10 = vst.msk [vmem:[#allocation0] sm:$0x1] %vm9, %v8
    %s11 = scalar_lea.vmem %s0, 14
    %v12 = vld [vmem:[%s11] sm:$0x1]
    %13 = vrot.lane.b32.xlu0 %v12, 112
    %v14 = vpop.permute.xlu0 %13
    %vm15 = vcmask 982912
    %16 = vst.msk [vmem:[#allocation0] sm:$0x1] %vm15, %v14
    %s17 = scalar_lea.vmem %s0, 13
    %v18 = vld [vmem:[%s17] sm:$0x1]
    %19 = vrot.lane.b32.xlu0 %v18, 104
    %v20 = vpop.permute.xlu0 %19
    %vm21 = vcmask 917312
    %22 = vst.msk [vmem:[#allocation0] sm:$0x1] %vm21, %v20
    %s23 = scalar_lea.vmem %s0, 12
    %v24 = vld [vmem:[%s23] sm:$0x1]
    %25 = vrot.lane.b32.xlu0 %v24, 96
    %v26 = vpop.permute.xlu0 %25
    %vm27 = vcmask 851712
    %28 = vst.msk [vmem:[#allocation0] sm:$0x1] %vm27, %v26
    %s29 = scalar_lea.vmem %s0, 11
    %v30 = vld [vmem:[%s29] sm:$0x1]
    %31 = vrot.lane.b32.xlu0 %v30, 88
    %v32 = vpop.permute.xlu0 %31
    %vm33 = vcmask 786112
    %34 = vst.msk [vmem:[#allocation0] sm:$0x1] %vm33, %v32
    %s35 = scalar_lea.vmem %s0, 10
    %v36 = vld [vmem:[%s35] sm:$0x1]
    %37 = vrot.lane.b32.xlu0 %v36, 80
    %v38 = vpop.permute.xlu0 %37
    %vm39 = vcmask 720512
    %40 = vst.msk [vmem:[#allocation0] sm:$0x1] %vm39, %v38
    %s41 = scalar_lea.vmem %s0, 9
    %v42 = vld [vmem:[%s41] sm:$0x1]
    %43 = vrot.lane.b32.xlu0 %v42, 72
    %v44 = vpop.permute.xlu0 %43
    %vm45 = vcmask 654912
    %46 = vst.msk [vmem:[#allocation0] sm:$0x1] %vm45, %v44
    %s47 = scalar_lea.vmem %s0, 8
    %v48 = vld [vmem:[%s47] sm:$0x1]
    %49 = vrot.lane.b32.xlu0 %v48, 64
    %v50 = vpop.permute.xlu0 %49
    %vm51 = vcmask 589312
    %52 = vst.msk [vmem:[#allocation0] sm:$0x1] %vm51, %v50
    %s53 = scalar_lea.vmem %s0, 7
    %v54 = vld [vmem:[%s53] sm:$0x1]
    %55 = vrot.lane.b32.xlu0 %v54, 56
    %v56 = vpop.permute.xlu0 %55
    %vm57 = vcmask 523712
    %58 = vst.msk [vmem:[#allocation0] sm:$0x1] %vm57, %v56
    %s59 = scalar_lea.vmem %s0, 6
    %v60 = vld [vmem:[%s59] sm:$0x1]
    %61 = vrot.lane.b32.xlu0 %v60, 48
    %v62 = vpop.permute.xlu0 %61
    %vm63 = vcmask 458112
    %64 = vst.msk [vmem:[#allocation0] sm:$0x1] %vm63, %v62
    %s65 = scalar_lea.vmem %s0, 5
    %v66 = vld [vmem:[%s65] sm:$0x1]
    %67 = vrot.lane.b32.xlu0 %v66, 40
    %v68 = vpop.permute.xlu0 %67
    %vm69 = vcmask 392512
    %70 = vst.msk [vmem:[#allocation0] sm:$0x1] %vm69, %v68
    %s71 = scalar_lea.vmem %s0, 4
    %v72 = vld [vmem:[%s71] sm:$0x1]
    %73 = vrot.lane.b32.xlu0 %v72, 32
    %v74 = vpop.permute.xlu0 %73
    %vm75 = vcmask 326912
    %76 = vst.msk [vmem:[#allocation0] sm:$0x1] %vm75, %v74
    %s77 = scalar_lea.vmem %s0, 3
    %v78 = vld [vmem:[%s77] sm:$0x1]
    %79 = vrot.lane.b32.xlu0 %v78, 24
    %v80 = vpop.permute.xlu0 %79
    %vm81 = vcmask 261312
    %82 = vst.msk [vmem:[#allocation0] sm:$0x1] %vm81, %v80
    %s83 = scalar_lea.vmem %s0, 2
    %v84 = vld [vmem:[%s83] sm:$0x1]
    %85 = vrot.lane.b32.xlu0 %v84, 16
    %v86 = vpop.permute.xlu0 %85
    %vm87 = vcmask 195712
    %88 = vst.msk [vmem:[#allocation0] sm:$0x1] %vm87, %v86
    %s89 = scalar_lea.vmem %s0, 1
    %v90 = vld [vmem:[%s89] sm:$0x1]
    %91 = vrot.lane.b32.xlu0 %v90, 8
    %v92 = vpop.permute.xlu0 %91
    %vm93 = vcmask 130112
    %94 = vst.msk [vmem:[#allocation0] sm:$0x1] %vm93, %v92
    %s96 = sshll.u32 1, 1
    %s97 = ssub.s32 %s96, 1
    %v99 = vld [vmem:[#allocation0] sm:%s97]
    %s100 = sshll.u32 1, 1
    %s101 = ssub.s32 %s100, 1
    %102 = vst [vmem:[%s1] sm:%s101] %v99

// kernel: block_stack_forward.1
$region0: #{block_stack_forward.1}
  #allocation0 [shape = 'u32[]', space=smem, size = 0x4, offset = 0x4, fixed_abs, tag = 'smem constant byte address 0x4 - core index']
  #allocation1 [shape = 'u32[144,128]{1,0:T(1,128)}', space=vmem, size = 0x12000, scoped, tag = 'internal scratch']
  #allocation2 [shape = 'bf16[36,128]{1,0:T(8,128)(2,1)}', space=vmem, size = 0x2800, scoped, tag = 'scratch operand']
  #allocation3 [shape = 'bf16[34,128]{1,0:T(8,128)(2,1)}', space=vmem, size = 0x2800, scoped, tag = 'scratch operand']
  %s0 = inlined_call_operand.vmem [shape: f32[2,16,128], index: 0, kind: input, shape index: {}]
  %s1 = inlined_call_operand.vmem [shape: bf16[4,384,128], index: 1, kind: input, shape index: {}]
  %s2 = inlined_call_operand.vmem [shape: f32[4,1,128], index: 2, kind: input, shape index: {}]
  %s3 = inlined_call_operand.vmem [shape: f32[2,16,128], index: 3, kind: output, shape index: {}]
  %s4 = sld [smem:[#allocation0]]
  $region26: #{block_stack_forward.1} parent=0
    _
  %s6 = ssub.s32 1, %s4
  %s7 = scalar_select 0, %s6, %s4
  // Predicated region
  $region2: #{block_stack_forward.1} parent=0 // pred_check
    _
  $region3: #{block_stack_forward.1} parent=0 // pred_check_branch
    %9 = sbr.rel (0) target = $region5
  $region4: #{block_stack_forward.1} parent=0 // pred_region
    _
  $region5: #{block_stack_forward.1} parent=0 // pred_fallthru
    _
  // Predicated region
  $region6: #{block_stack_forward.1} parent=0 // pred_check
    _
  $region7: #{block_stack_forward.1} parent=0 // pred_check_branch
    %11 = sbr.rel (0) target = $region9
  $region8: #{block_stack_forward.1} parent=0 // pred_region
    _
  $region9: #{block_stack_forward.1} parent=0 // pred_fallthru
    _
  // Predicated region
  $region10: #{block_stack_forward.1} parent=0 // pred_check
    _
  $region11: #{block_stack_forward.1} parent=0 // pred_check_branch
    %13 = sbr.rel (0) target = $region13
  $region12: #{block_stack_forward.1} parent=0 // pred_region
    _
  $region13: #{block_stack_forward.1} parent=0 // pred_fallthru
    _
  %p15 = scmp.eq.s32.totalorder 0, 0
  // Predicated region
  $region14: #{block_stack_forward.1} parent=0 // pred_check
    %p16 = pneg %p15
  $region15: #{block_stack_forward.1} parent=0 // pred_check_branch
    %18 = sbr.rel (%p16) target = $region17
  $region16: #{block_stack_forward.1} parent=0 // pred_region
    %19 = vst [vmem:[#allocation2] sm:$0xf] 0
    %20 = vst [vmem:[#allocation2 + $0x4] sm:$0xf] 0
    %21 = vst [vmem:[#allocation2 + $0x8] sm:$0xf] 0
    %22 = vst [vmem:[#allocation2 + $0xc] sm:$0xf] 0
    %23 = vst [vmem:[#allocation2 + $0x10] sm:$0x3] 0
  $region17: #{block_stack_forward.1} parent=0 // pred_fallthru
    _
  %v24 = vld [vmem:[%s0] sm:$0xff]
  %v25 = vld [vmem:[%s0 + $0x8] sm:$0xff]
  %v26 = vpack.c.bf16 %v25, %v24
  %v28 = vunpack.c.l.b16 %v26
  %v29 = vunpack.c.h.b16 %v26
  %v30 = vpack.c.b16 %v28, %v28
  %v31 = vpack.c.b16 %v29, %v29
  %vm32 = vsmask.f32 256
  %vm33 = vsmask.f32 4368
  %vm34 = vmor %vm32, %vm33
  %v36 = vshrl.u32 %v30, 16
  %v38 = vrot.slane %v36, 7
  %v39 = vshll.u32 %v30, 16
  %v41 = vor.u32 %v38, %v39
  %v42 = vrot.slane %v38, 4
  %v44 = vshrl.u32 %v31, 16
  %v46 = vrot.slane %v44, 7
  %v47 = vshll.u32 %v31, 16
  %v49 = vor.u32 %v46, %v47
  %v50 = vsel %vm34, %v42, %v49
  %v51 = vrot.slane %v46, 4
  %vm55 = vcmask 1043456
  %vm56 = vsmask.f32 7938
  %vm57 = vmand %vm55, %vm56
  %v58 = vld [vmem:[#allocation2] sm:$0xf]
  %v59 = vsel %vm57, %v41, %v58
  %60 = vst [vmem:[#allocation2] sm:$0xf] %v59
  %61 = vst [vmem:[#allocation2 + $0x4] sm:$0xf] %v50
  %vm62 = vcmask 1040384
  %vm63 = vmand %vm62, %vm32
  %v64 = vld [vmem:[#allocation2 + $0x8] sm:$0x1]
  %v65 = vsel %vm63, %v51, %v64
  %66 = vst [vmem:[#allocation2 + $0x8] sm:$0x1] %v65
  %s67 = scalar_lea.vmem %s0, 16
  %v68 = vld [vmem:[%s67] sm:$0xff]
  %v69 = vld [vmem:[%s67 + $0x8] sm:$0xff]
  %v70 = vpack.c.bf16 %v69, %v68
  %v72 = vunpack.c.l.b16 %v70
  %v73 = vunpack.c.h.b16 %v70
  %v74 = vpack.c.b16 %v72, %v72
  %v75 = vpack.c.b16 %v73, %v73
  %vm76 = vsmask.f32 1280
  %vm77 = vsmask.f32 5392
  %vm78 = vmor %vm76, %vm77
  %v80 = vshrl.u32 %v74, 16
  %v82 = vrot.slane %v80, 6
  %v83 = vshll.u32 %v74, 16
  %v85 = vrot.slane %v83, 7
  %v86 = vor.u32 %v82, %v85
  %v87 = vrot.slane %v86, 4
  %v89 = vshrl.u32 %v75, 16
  %v91 = vrot.slane %v89, 6
  %v92 = vshll.u32 %v75, 16
  %v94 = vrot.slane %v92, 7
  %v95 = vor.u32 %v91, %v94
  %v96 = vsel %vm78, %v87, %v95
  %v97 = vrot.slane %v95, 4
  %vm101 = vcmask 1043457
  %vm102 = vsmask.f32 7942
  %vm103 = vmand %vm101, %vm102
  %v104 = vld [vmem:[#allocation2 + $0x8] sm:$0xe]
  %v105 = vsel %vm103, %v86, %v104
  %106 = vst [vmem:[#allocation2 + $0x8] sm:$0xe] %v105
  %107 = vst [vmem:[#allocation2 + $0xc] sm:$0xf] %v96
  %vm108 = vcmask 1041408
  %vm109 = vmand %vm108, %vm76
  %v110 = vld [vmem:[#allocation2 + $0x10] sm:$0x3]
  %v111 = vsel %vm109, %v97, %v110
  %112 = vst [vmem:[#allocation2 + $0x10] sm:$0x3] %v111
  %v113 = vlaneseq
  %v114 = vshrl.u32 %v113, 7
  %v115 = vadd.s32 %v114, 8
  %v116 = vadd.s32 %v114, 16
  %v117 = vadd.s32 %v114, 24
  %v118 = vadd.s32 %v114, 32
  %vm119 = vcmp.ge.s32.totalorder %v114, 16
  %vm120 = vcmp.ge.s32.totalorder %v115, 16
  %vm121 = vcmp.ge.s32.totalorder %v116, 16
  %vm122 = vcmp.ge.s32.totalorder %v117, 16
  %vm123 = vcmp.ge.s32.totalorder %v118, 16
  %vm124 = vcmp.le.s32.totalorder %v114, 17
  %vm125 = vcmp.le.s32.totalorder %v115, 17
  %vm126 = vcmp.le.s32.totalorder %v116, 17
  %vm127 = vcmp.le.s32.totalorder %v117, 17
  %vm128 = vcmp.le.s32.totalorder %v118, 17
  %vm129 = vmand %vm119, %vm124
  %vm130 = vmand %vm120, %vm125
  %vm131 = vmand %vm121, %vm126
  %vm132 = vmand %vm122, %vm127
  %vm133 = vmand %vm123, %vm128
  %v134 = vsel %vm129, 0.0, 1.0
  %v135 = vsel %vm130, 0.0, 1.0
  %v136 = vsel %vm131, 0.0, 1.0
  %v137 = vsel %vm132, 0.0, 1.0
  %v138 = vsel %vm133, 0.0, 1.0
  %v139 = vld [vmem:[#allocation2] sm:$0xf]
  %v140 = vld [vmem:[#allocation2 + $0x4] sm:$0xf]
  %v141 = vld [vmem:[#allocation2 + $0x8] sm:$0xf]
  %v142 = vld [vmem:[#allocation2 + $0xc] sm:$0xf]
  %v143 = vld [vmem:[#allocation2 + $0x10] sm:$0x3]
  %vm144 = vsmask.f32 3328
  %vm145 = vsmask.f32 7440
  %vm146 = vmor %vm144, %vm145
  %v148 = vshrl.u32 %v139, 16
  %v150 = vrot.slane %v148, 4
  %v151 = vshll.u32 %v139, 16
  %v153 = vrot.slane %v151, 5
  %v154 = vor.u32 %v150, %v153
  %v155 = vrot.slane %v154, 4
  %v157 = vshll.u32 %v140, 16
  %v159 = vrot.slane %v157, 5
  %v160 = vsel %vm146, %v155, %v159
  %v161 = vshrl.u32 %v140, 16
  %v163 = vrot.slane %v161, 4
  %v164 = vor.u32 %v163, %v159
  %v165 = vrot.slane %v164, 4
  %v167 = vshll.u32 %v141, 16
  %v169 = vrot.slane %v167, 5
  %v170 = vsel %vm146, %v165, %v169
  %v171 = vshrl.u32 %v141, 16
  %v173 = vrot.slane %v171, 4
  %v174 = vor.u32 %v173, %v169
  %v175 = vrot.slane %v174, 4
  %v177 = vshll.u32 %v142, 16
  %v179 = vrot.slane %v177, 5
  %v180 = vsel %vm146, %v175, %v179
  %v181 = vshrl.u32 %v142, 16
  %v183 = vrot.slane %v181, 4
  %v184 = vor.u32 %v183, %v179
  %v185 = vrot.slane %v184, 4
  %v187 = vshll.u32 %v143, 16
  %v189 = vrot.slane %v187, 5
  %v190 = vsel %vm146, %v185, %v189
  %v191 = vshrl.u32 %v143, 16
  %v193 = vrot.slane %v191, 4
  %v194 = vor.u32 %v193, %v189
  %v195 = vrot.slane %v194, 4
  %201 = vst [vmem:[#allocation3] sm:$0xf] %v160
  %202 = vst [vmem:[#allocation3 + $0x4] sm:$0xf] %v170
  %203 = vst [vmem:[#allocation3 + $0x8] sm:$0xf] %v180
  %204 = vst [vmem:[#allocation3 + $0xc] sm:$0xf] %v190
  %205 = vst [vmem:[#allocation3 + $0x10] sm:$0x1] %v195
  %v206 = vld [vmem:[#allocation2] sm:$0xf]
  %v207 = vld [vmem:[#allocation2 + $0x4] sm:$0xf]
  %v208 = vld [vmem:[#allocation2 + $0x8] sm:$0xf]
  %v209 = vld [vmem:[#allocation2 + $0xc] sm:$0xf]
  %v210 = vld [vmem:[#allocation2 + $0x10] sm:$0x1]
  %v211 = vld [vmem:[#allocation2 + $0x10] sm:$0x3]
  %v212 = vld [vmem:[#allocation2] sm:$0xe]
  %v218 = vunpack.c.l.b16 %v206
  %v219 = vunpack.c.l.b16 %v207
  %v220 = vunpack.c.l.b16 %v208
  %v221 = vunpack.c.l.b16 %v209
  %v222 = vunpack.c.l.b16 %v210
  %v223 = vpack.c.b16 %v219, %v218
  %v224 = vpack.c.b16 %v221, %v220
  %v225 = vpack.c.b16 %v222, %v222
  %v230 = vunpack.c.l.b16 %v211
  %v231 = vpack.c.b16 %v230, %v230
  %vm232 = vsmask.f32 7424
  %v234 = vshrl.u32 %v223, 16
  %v236 = vshll.u32 %v223, 16
  %v238 = vrot.slane %v236, 1
  %v239 = vor.u32 %v234, %v238
  %v241 = vshll.u32 %v224, 16
  %v243 = vrot.slane %v241, 1
  %v244 = vsel %vm232, %v239, %v243
  %v245 = vshrl.u32 %v224, 16
  %v247 = vor.u32 %v245, %v243
  %v249 = vshll.u32 %v231, 16
  %v251 = vrot.slane %v249, 1
  %v252 = vsel %vm232, %v247, %v251
  %v253 = vshrl.u32 %v231, 16
  %v255 = vor.u32 %v253, %v251
  %v260 = vunpack.c.l.b16 %v212
  %v261 = vpack.c.b16 %v219, %v260
  %vm262 = vcmask 1046528
  %v263 = vrot.slane %v261, 1
  %v264 = vrot.slane %v224, 1
  %v265 = vsel %vm262, %v263, %v264
  %v266 = vrot.slane %v231, 1
  %v267 = vsel %vm262, %v264, %v266
  %v271 = vld [vmem:[%s1] sm:$0xf]
  %v272 = vld [vmem:[%s1 + $0x4] sm:$0xf]
  %v273 = vld [vmem:[%s1 + $0x8] sm:$0xf]
  %v274 = vld [vmem:[%s1 + $0xc] sm:$0xf]
  %v275 = vld [vmem:[%s1 + $0x10] sm:$0xf]
  %v276 = vld [vmem:[%s1 + $0x14] sm:$0xf]
  %v277 = vld [vmem:[%s1 + $0x18] sm:$0xf]
  %v278 = vld [vmem:[%s1 + $0x1c] sm:$0xf]
  %v279 = vld [vmem:[%s1 + $0x20] sm:$0xf]
  %v280 = vld [vmem:[%s1 + $0x24] sm:$0xf]
  %v281 = vld [vmem:[%s1 + $0x28] sm:$0xf]
  %v282 = vld [vmem:[%s1 + $0x2c] sm:$0xf]
  %v283 = vld [vmem:[%s1 + $0x30] sm:$0xf]
  %v284 = vld [vmem:[%s1 + $0x34] sm:$0xf]
  %v285 = vld [vmem:[%s1 + $0x38] sm:$0xf]
  %v286 = vld [vmem:[%s1 + $0x3c] sm:$0xf]
  %v287 = vld [vmem:[%s1 + $0x40] sm:$0xf]
  %v288 = vld [vmem:[%s1 + $0x44] sm:$0xf]
  %v289 = vld [vmem:[%s1 + $0x48] sm:$0xf]
  %v290 = vld [vmem:[%s1 + $0x4c] sm:$0xf]
  %v291 = vld [vmem:[%s1 + $0x50] sm:$0xf]
  %v292 = vld [vmem:[%s1 + $0x54] sm:$0xf]
  %v293 = vld [vmem:[%s1 + $0x58] sm:$0xf]
  %v294 = vld [vmem:[%s1 + $0x5c] sm:$0xf]
  %v295 = vld [vmem:[%s1 + $0x60] sm:$0xf]
  %v296 = vld [vmem:[%s1 + $0x64] sm:$0xf]
  %v297 = vld [vmem:[%s1 + $0x68] sm:$0xf]
  %v298 = vld [vmem:[%s1 + $0x6c] sm:$0xf]
  %v299 = vld [vmem:[%s1 + $0x70] sm:$0xf]
  %v300 = vld [vmem:[%s1 + $0x74] sm:$0xf]
  %v301 = vld [vmem:[%s1 + $0x78] sm:$0xf]
  %v302 = vld [vmem:[%s1 + $0x7c] sm:$0xf]
  %v303 = vld [vmem:[%s1 + $0x80] sm:$0xf]
  %v304 = vld [vmem:[%s1 + $0x84] sm:$0xf]
  %v305 = vld [vmem:[%s1 + $0x88] sm:$0xf]
  %v306 = vld [vmem:[%s1 + $0x8c] sm:$0xf]
  %v307 = vld [vmem:[%s1 + $0x90] sm:$0xf]
  %v308 = vld [vmem:[%s1 + $0x94] sm:$0xf]
  %v309 = vld [vmem:[%s1 + $0x98] sm:$0xf]
  %v310 = vld [vmem:[%s1 + $0x9c] sm:$0xf]
  %v311 = vld [vmem:[%s1 + $0xa0] sm:$0xf]
  %v312 = vld [vmem:[%s1 + $0xa4] sm:$0xf]
  %v313 = vld [vmem:[%s1 + $0xa8] sm:$0xf]
  %v314 = vld [vmem:[%s1 + $0xac] sm:$0xf]
  %v315 = vld [vmem:[%s1 + $0xb0] sm:$0xf]
  %v316 = vld [vmem:[%s1 + $0xb4] sm:$0xf]
  %v317 = vld [vmem:[%s1 + $0xb8] sm:$0xf]
  %v318 = vld [vmem:[%s1 + $0xbc] sm:$0xf]
  %v319 = vld [vmem:[%s2] sm:$0x1]
  %v321 = vlaneseq
  %v322 = vshrl.u32 %v321, 7
  %v323 = vsub.s32 0, %v322
  %v324 = vrot.slane %v319, %v323
  %v374 = vunpack.c.l.b16 %v271
  %v375 = vunpack.c.l.b16 %v272
  %v376 = vunpack.c.l.b16 %v273
  %v377 = vunpack.c.l.b16 %v274
  %v378 = vunpack.c.l.b16 %v275
  %v379 = vunpack.c.l.b16 %v276
  %v380 = vunpack.c.l.b16 %v277
  %v381 = vunpack.c.l.b16 %v278
  %v382 = vunpack.c.l.b16 %v279
  %v383 = vunpack.c.l.b16 %v280
  %v384 = vunpack.c.l.b16 %v281
  %v385 = vunpack.c.l.b16 %v282
  %v386 = vunpack.c.l.b16 %v283
  %v387 = vunpack.c.l.b16 %v284
  %v388 = vunpack.c.l.b16 %v285
  %v389 = vunpack.c.l.b16 %v286
  %v390 = vunpack.c.l.b16 %v287
  %v391 = vunpack.c.l.b16 %v288
  %v392 = vunpack.c.l.b16 %v289
  %v393 = vunpack.c.l.b16 %v290
  %v394 = vunpack.c.l.b16 %v291
  %v395 = vunpack.c.l.b16 %v292
  %v396 = vunpack.c.l.b16 %v293
  %v397 = vunpack.c.l.b16 %v294
  %v398 = vunpack.c.l.b16 %v295
  %v399 = vunpack.c.l.b16 %v296
  %v400 = vunpack.c.l.b16 %v297
  %v401 = vunpack.c.l.b16 %v298
  %v402 = vunpack.c.l.b16 %v299
  %v403 = vunpack.c.l.b16 %v300
  %v404 = vunpack.c.l.b16 %v301
  %v405 = vunpack.c.l.b16 %v302
  %v406 = vunpack.c.l.b16 %v303
  %v407 = vunpack.c.l.b16 %v304
  %v408 = vunpack.c.l.b16 %v305
  %v409 = vunpack.c.l.b16 %v306
  %v410 = vunpack.c.l.b16 %v307
  %v411 = vunpack.c.l.b16 %v308
  %v412 = vunpack.c.l.b16 %v309
  %v413 = vunpack.c.l.b16 %v310
  %v414 = vunpack.c.l.b16 %v311
  %v415 = vunpack.c.l.b16 %v312
  %v416 = vunpack.c.l.b16 %v313
  %v417 = vunpack.c.l.b16 %v314
  %v418 = vunpack.c.l.b16 %v315
  %v419 = vunpack.c.l.b16 %v316
  %v420 = vunpack.c.l.b16 %v317
  %v421 = vunpack.c.l.b16 %v318
  %v422 = vpack.c.b16 %v375, %v374
  %v423 = vpack.c.b16 %v377, %v376
  %v424 = vpack.c.b16 %v379, %v378
  %v425 = vpack.c.b16 %v381, %v380
  %v426 = vpack.c.b16 %v383, %v382
  %v427 = vpack.c.b16 %v385, %v384
  %v428 = vpack.c.b16 %v387, %v386
  %v429 = vpack.c.b16 %v389, %v388
  %v430 = vpack.c.b16 %v391, %v390
  %v431 = vpack.c.b16 %v393, %v392
  %v432 = vpack.c.b16 %v395, %v394
  %v433 = vpack.c.b16 %v397, %v396
  %v434 = vpack.c.b16 %v399, %v398
  %v435 = vpack.c.b16 %v401, %v400
  %v436 = vpack.c.b16 %v403, %v402
  %v437 = vpack.c.b16 %v405, %v404
  %v438 = vpack.c.b16 %v407, %v406
  %v439 = vpack.c.b16 %v409, %v408
  %v440 = vpack.c.b16 %v411, %v410
  %v441 = vpack.c.b16 %v413, %v412
  %v442 = vpack.c.b16 %v415, %v414
  %v443 = vpack.c.b16 %v417, %v416
  %v444 = vpack.c.b16 %v419, %v418
  %v445 = vpack.c.b16 %v421, %v420
  %470 = vmatprep.subr.bf16.mxu0 0
  %471 = vmatpush1.bf16.msra.mxu0 %v429
  %472 = vmatprep.subr.bf16.mxu0 0
  %473 = vmatpush1.bf16.msra.mxu0 %v428
  %474 = vmatprep.subr.bf16.mxu0 0
  %475 = vmatpush1.bf16.msra.mxu0 %v427
  %476 = vmatprep.subr.bf16.mxu0 0
  %477 = vmatpush1.bf16.msra.mxu0 %v426
  %478 = vmatprep.subr.bf16.mxu0 0
  %479 = vmatpush1.bf16.msra.mxu0 %v425
  %480 = vmatprep.subr.bf16.mxu0 0
  %481 = vmatpush1.bf16.msra.mxu0 %v424
  %482 = vmatprep.subr.bf16.mxu0 0
  %483 = vmatpush1.bf16.msra.mxu0 %v423
  %484 = vmatprep.subr.bf16.mxu0 0
  %485 = vmatpush1.bf16.msra.mxu0 %v422
  %486 = vmatprep.subr.bf16.mxu0 0
  %487 = vmatpush2.bf16.msra.mxu0 %v437
  %488 = vmatprep.subr.bf16.mxu0 0
  %489 = vmatpush2.bf16.msra.mxu0 %v436
  %490 = vmatprep.subr.bf16.mxu0 0
  %491 = vmatpush2.bf16.msra.mxu0 %v435
  %492 = vmatprep.subr.bf16.mxu0 0
  %493 = vmatpush2.bf16.msra.mxu0 %v434
  %494 = vmatprep.subr.bf16.mxu0 0
  %495 = vmatpush2.bf16.msra.mxu0 %v433
  %496 = vmatprep.subr.bf16.mxu0 0
  %497 = vmatpush2.bf16.msra.mxu0 %v432
  %498 = vmatprep.subr.bf16.mxu0 0
  %499 = vmatpush2.bf16.msra.mxu0 %v431
  %500 = vmatprep.subr.bf16.mxu0 0
  %501 = vmatpush2.bf16.msra.mxu0 %v430
  %502 = vmatprep.mubr.bf16.mxu0 %v244
  %503 = vmatmul.mubr.bf16.gmra.mxu0 %v223
  %v504 = vpop.f32.mrf.mxu0
  %v505 = vadd.f32 %v324, %v504
  %v506 = vpop.f32.mrf.mxu0
  %v507 = vpop.f32.mrf.mxu0
  %v508 = vadd.f32 %v324, %v507
  %v509 = vpop.f32.mrf.mxu0
  %510 = vmatprep.mubr.bf16.mxu0 %v252
  %511 = vmatmul.mubr.bf16.gmra.mxu0 %v224
  %v512 = vpop.f32.mrf.mxu0
  %v513 = vadd.f32 %v324, %v512
  %v514 = vpop.f32.mrf.mxu0
  %v515 = vpop.f32.mrf.mxu0
  %v516 = vadd.f32 %v324, %v515
  %v517 = vpop.f32.mrf.mxu0
  %518 = vmatprep.mubr.bf16.mxu0 %v255
  %519 = vmatmul.mubr.bf16.gmra.mxu0 %v225
  %v520 = vpop.f32.mrf.mxu0
  %v521 = vadd.f32 %v324, %v520
  %v522 = vpop.f32.mrf.mxu0
  %v523 = vpop.f32.mrf.mxu0
  %v524 = vpop.f32.mrf.mxu0
  %525 = vdwg.mxu0
  %526 = vmatprep.subr.bf16.mxu0 0
  %527 = vmatpush1.bf16.msra.mxu0 %v445
  %528 = vmatprep.subr.bf16.mxu0 0
  %529 = vmatpush1.bf16.msra.mxu0 %v444
  %530 = vmatprep.subr.bf16.mxu0 0
  %531 = vmatpush1.bf16.msra.mxu0 %v443
  %532 = vmatprep.subr.bf16.mxu0 0
  %533 = vmatpush1.bf16.msra.mxu0 %v442
  %534 = vmatprep.subr.bf16.mxu0 0
  %535 = vmatpush1.bf16.msra.mxu0 %v441
  %536 = vmatprep.subr.bf16.mxu0 0
  %537 = vmatpush1.bf16.msra.mxu0 %v440
  %538 = vmatprep.subr.bf16.mxu0 0
  %539 = vmatpush1.bf16.msra.mxu0 %v439
  %540 = vmatprep.subr.bf16.mxu0 0
  %541 = vmatpush1.bf16.msra.mxu0 %v438
  %542 = vmatprep.subr.bf16.mxu0 0
  %543 = vmatpush2.bf16.msra.mxu0 0
  %544 = vmatprep.subr.bf16.mxu0 0
  %545 = vmatpush2.bf16.msra.mxu0 0
  %546 = vmatprep.subr.bf16.mxu0 0
  %547 = vmatpush2.bf16.msra.mxu0 0
  %548 = vmatprep.subr.bf16.mxu0 0
  %549 = vmatpush2.bf16.msra.mxu0 0
  %550 = vmatprep.subr.bf16.mxu0 0
  %551 = vmatpush2.bf16.msra.mxu0 0
  %552 = vmatprep.subr.bf16.mxu0 0
  %553 = vmatpush2.bf16.msra.mxu0 0
  %554 = vmatprep.subr.bf16.mxu0 0
  %555 = vmatpush2.bf16.msra.mxu0 0
  %556 = vmatprep.subr.bf16.mxu0 0
  %557 = vmatpush2.bf16.msra.mxu0 0
  %558 = vmatprep.mubr.bf16.mxu0 0
  %559 = vmatmul.mubr.bf16.gmra.mxu0 %v265
  %v560 = vpop.f32.mrf.mxu0
  %v561 = vadd.f32 %v505, %v560
  %v562 = vpop.f32.mrf.mxu0
  %v563 = vpop.f32.mrf.mxu0
  %v564 = vadd.f32 %v508, %v563
  %v565 = vpop.f32.mrf.mxu0
  %566 = vmatprep.mubr.bf16.mxu0 0
  %567 = vmatmul.mubr.bf16.gmra.mxu0 %v267
  %v568 = vpop.f32.mrf.mxu0
  %v569 = vadd.f32 %v513, %v568
  %v570 = vpop.f32.mrf.mxu0
  %v571 = vpop.f32.mrf.mxu0
  %v572 = vadd.f32 %v516, %v571
  %v573 = vpop.f32.mrf.mxu0
  %574 = vmatprep.mubr.bf16.mxu0 0
  %575 = vmatmul.mubr.bf16.gmra.mxu0 %v266
  %v576 = vpop.f32.mrf.mxu0
  %v577 = vadd.f32 %v521, %v576
  %v578 = vpop.f32.mrf.mxu0
  %v579 = vpop.f32.mrf.mxu0
  %v580 = vpop.f32.mrf.mxu0
  %581 = vdwg.mxu0
  %v582 = vmax.f32 %v561, 0.0
  %v583 = vmax.f32 %v564, 0.0
  %v584 = vmax.f32 %v569, 0.0
  %v585 = vmax.f32 %v572, 0.0
  %v586 = vmax.f32 %v577, 0.0
  %v587 = vmul.f32 %v582, %v134
  %v588 = vmul.f32 %v583, %v135
  %v589 = vmul.f32 %v584, %v136
  %v590 = vmul.f32 %v585, %v137
  %v591 = vmul.f32 %v586, %v138
  %v592 = vpack.c.bf16 %v588, %v587
  %v593 = vpack.c.bf16 %v590, %v589
  %v594 = vpack.c.bf16 %v591, %v591
  %v598 = vunpack.c.l.b16 %v592
  %v599 = vunpack.c.h.b16 %v592
  %v600 = vunpack.c.l.b16 %v593
  %v601 = vunpack.c.h.b16 %v593
  %v602 = vunpack.c.l.b16 %v594
  %v603 = vpack.c.b16 %v598, %v598
  %v604 = vpack.c.b16 %v599, %v599
  %v605 = vpack.c.b16 %v600, %v600
  %v606 = vpack.c.b16 %v601, %v601
  %v607 = vpack.c.b16 %v602, %v602
  %v609 = vshrl.u32 %v603, 16
  %v611 = vrot.slane %v609, 7
  %v612 = vshll.u32 %v603, 16
  %v614 = vor.u32 %v611, %v612
  %v615 = vrot.slane %v611, 4
  %v617 = vshrl.u32 %v604, 16
  %v619 = vrot.slane %v617, 7
  %v620 = vshll.u32 %v604, 16
  %v622 = vor.u32 %v619, %v620
  %v623 = vsel %vm34, %v615, %v622
  %v624 = vrot.slane %v619, 4
  %v626 = vshrl.u32 %v605, 16
  %v628 = vrot.slane %v626, 7
  %v629 = vshll.u32 %v605, 16
  %v631 = vor.u32 %v628, %v629
  %v632 = vsel %vm34, %v624, %v631
  %v633 = vrot.slane %v628, 4
  %v635 = vshrl.u32 %v606, 16
  %v637 = vrot.slane %v635, 7
  %v638 = vshll.u32 %v606, 16
  %v640 = vor.u32 %v637, %v638
  %v641 = vsel %vm34, %v633, %v640
  %v642 = vrot.slane %v637, 4
  %v644 = vshrl.u32 %v607, 16
  %v646 = vrot.slane %v644, 7
  %v647 = vshll.u32 %v607, 16
  %v649 = vor.u32 %v646, %v647
  %v650 = vsel %vm34, %v642, %v649
  %v656 = vsel %vm57, %v614, %v206
  %657 = vst [vmem:[#allocation2] sm:$0xf] %v656
  %658 = vst [vmem:[#allocation2 + $0x4] sm:$0xf] %v623
  %659 = vst [vmem:[#allocation2 + $0x8] sm:$0xf] %v632
  %660 = vst [vmem:[#allocation2 + $0xc] sm:$0xf] %v641
  %v661 = vld [vmem:[#allocation2 + $0x10] sm:$0x3]
  %v662 = vsel %vm109, %v650, %v661
  %663 = vst [vmem:[#allocation2 + $0x10] sm:$0x3] %v662
  %v664 = vld [vmem:[#allocation2] sm:$0xf]
  %v665 = vld [vmem:[#allocation2 + $0x4] sm:$0xf]
  %v666 = vld [vmem:[#allocation2 + $0x8] sm:$0xf]
  %v667 = vld [vmem:[#allocation2 + $0xc] sm:$0xf]
  %v668 = vld [vmem:[#allocation2 + $0x10] sm:$0x1]
  %v669 = vld [vmem:[#allocation2 + $0x10] sm:$0x3]
  %v670 = vld [vmem:[#allocation2] sm:$0xe]
  %v676 = vunpack.c.l.b16 %v664
  %v677 = vunpack.c.l.b16 %v665
  %v678 = vunpack.c.l.b16 %v666
  %v679 = vunpack.c.l.b16 %v667
  %v680 = vunpack.c.l.b16 %v668
  %v681 = vpack.c.b16 %v677, %v676
  %v682 = vpack.c.b16 %v679, %v678
  %v683 = vpack.c.b16 %v680, %v680
  %v688 = vunpack.c.l.b16 %v669
  %v689 = vpack.c.b16 %v688, %v688
  %v691 = vshrl.u32 %v681, 16
  %v693 = vshll.u32 %v681, 16
  %v695 = vrot.slane %v693, 1
  %v696 = vor.u32 %v691, %v695
  %v698 = vshll.u32 %v682, 16
  %v700 = vrot.slane %v698, 1
  %v701 = vsel %vm232, %v696, %v700
  %v702 = vshrl.u32 %v682, 16
  %v704 = vor.u32 %v702, %v700
  %v706 = vshll.u32 %v689, 16
  %v708 = vrot.slane %v706, 1
  %v709 = vsel %vm232, %v704, %v708
  %v710 = vshrl.u32 %v689, 16
  %v712 = vor.u32 %v710, %v708
  %v717 = vunpack.c.l.b16 %v670
  %v718 = vpack.c.b16 %v677, %v717
  %v719 = vrot.slane %v718, 1
  %v720 = vrot.slane %v682, 1
  %v721 = vsel %vm262, %v719, %v720
  %v722 = vrot.slane %v689, 1
  %v723 = vsel %vm262, %v720, %v722
  %s727 = scalar_lea.vmem %s1, 192
  %v728 = vld [vmem:[%s727] sm:$0xf]
  %v729 = vld [vmem:[%s727 + $0x4] sm:$0xf]
  %v730 = vld [vmem:[%s727 + $0x8] sm:$0xf]
  %v731 = vld [vmem:[%s727 + $0xc] sm:$0xf]
  %v732 = vld [vmem:[%s727 + $0x10] sm:$0xf]
  %v733 = vld [vmem:[%s727 + $0x14] sm:$0xf]
  %v734 = vld [vmem:[%s727 + $0x18] sm:$0xf]
  %v735 = vld [vmem:[%s727 + $0x1c] sm:$0xf]
  %v736 = vld [vmem:[%s727 + $0x20] sm:$0xf]
  %v737 = vld [vmem:[%s727 + $0x24] sm:$0xf]
  %v738 = vld [vmem:[%s727 + $0x28] sm:$0xf]
  %v739 = vld [vmem:[%s727 + $0x2c] sm:$0xf]
  %v740 = vld [vmem:[%s727 + $0x30] sm:$0xf]
  %v741 = vld [vmem:[%s727 + $0x34] sm:$0xf]
  %v742 = vld [vmem:[%s727 + $0x38] sm:$0xf]
  %v743 = vld [vmem:[%s727 + $0x3c] sm:$0xf]
  %v744 = vld [vmem:[%s727 + $0x40] sm:$0xf]
  %v745 = vld [vmem:[%s727 + $0x44] sm:$0xf]
  %v746 = vld [vmem:[%s727 + $0x48] sm:$0xf]
  %v747 = vld [vmem:[%s727 + $0x4c] sm:$0xf]
  %v748 = vld [vmem:[%s727 + $0x50] sm:$0xf]
  %v749 = vld [vmem:[%s727 + $0x54] sm:$0xf]
  %v750 = vld [vmem:[%s727 + $0x58] sm:$0xf]
  %v751 = vld [vmem:[%s727 + $0x5c] sm:$0xf]
  %v752 = vld [vmem:[%s727 + $0x60] sm:$0xf]
  %v753 = vld [vmem:[%s727 + $0x64] sm:$0xf]
  %v754 = vld [vmem:[%s727 + $0x68] sm:$0xf]
  %v755 = vld [vmem:[%s727 + $0x6c] sm:$0xf]
  %v756 = vld [vmem:[%s727 + $0x70] sm:$0xf]
  %v757 = vld [vmem:[%s727 + $0x74] sm:$0xf]
  %v758 = vld [vmem:[%s727 + $0x78] sm:$0xf]
  %v759 = vld [vmem:[%s727 + $0x7c] sm:$0xf]
  %v760 = vld [vmem:[%s727 + $0x80] sm:$0xf]
  %v761 = vld [vmem:[%s727 + $0x84] sm:$0xf]
  %v762 = vld [vmem:[%s727 + $0x88] sm:$0xf]
  %v763 = vld [vmem:[%s727 + $0x8c] sm:$0xf]
  %v764 = vld [vmem:[%s727 + $0x90] sm:$0xf]
  %v765 = vld [vmem:[%s727 + $0x94] sm:$0xf]
  %v766 = vld [vmem:[%s727 + $0x98] sm:$0xf]
  %v767 = vld [vmem:[%s727 + $0x9c] sm:$0xf]
  %v768 = vld [vmem:[%s727 + $0xa0] sm:$0xf]
  %v769 = vld [vmem:[%s727 + $0xa4] sm:$0xf]
  %v770 = vld [vmem:[%s727 + $0xa8] sm:$0xf]
  %v771 = vld [vmem:[%s727 + $0xac] sm:$0xf]
  %v772 = vld [vmem:[%s727 + $0xb0] sm:$0xf]
  %v773 = vld [vmem:[%s727 + $0xb4] sm:$0xf]
  %v774 = vld [vmem:[%s727 + $0xb8] sm:$0xf]
  %v775 = vld [vmem:[%s727 + $0xbc] sm:$0xf]
  %s776 = scalar_lea.vmem %s2, 1
  %v777 = vld [vmem:[%s776] sm:$0x1]
  %v779 = vlaneseq
  %v780 = vshrl.u32 %v779, 7
  %v781 = vsub.s32 0, %v780
  %v782 = vrot.slane %v777, %v781
  %v832 = vunpack.c.l.b16 %v728
  %v833 = vunpack.c.l.b16 %v729
  %v834 = vunpack.c.l.b16 %v730
  %v835 = vunpack.c.l.b16 %v731
  %v836 = vunpack.c.l.b16 %v732
  %v837 = vunpack.c.l.b16 %v733
  %v838 = vunpack.c.l.b16 %v734
  %v839 = vunpack.c.l.b16 %v735
  %v840 = vunpack.c.l.b16 %v736
  %v841 = vunpack.c.l.b16 %v737
  %v842 = vunpack.c.l.b16 %v738
  %v843 = vunpack.c.l.b16 %v739
  %v844 = vunpack.c.l.b16 %v740
  %v845 = vunpack.c.l.b16 %v741
  %v846 = vunpack.c.l.b16 %v742
  %v847 = vunpack.c.l.b16 %v743
  %v848 = vunpack.c.l.b16 %v744
  %v849 = vunpack.c.l.b16 %v745
  %v850 = vunpack.c.l.b16 %v746
  %v851 = vunpack.c.l.b16 %v747
  %v852 = vunpack.c.l.b16 %v748
  %v853 = vunpack.c.l.b16 %v749
  %v854 = vunpack.c.l.b16 %v750
  %v855 = vunpack.c.l.b16 %v751
  %v856 = vunpack.c.l.b16 %v752
  %v857 = vunpack.c.l.b16 %v753
  %v858 = vunpack.c.l.b16 %v754
  %v859 = vunpack.c.l.b16 %v755
  %v860 = vunpack.c.l.b16 %v756
  %v861 = vunpack.c.l.b16 %v757
  %v862 = vunpack.c.l.b16 %v758
  %v863 = vunpack.c.l.b16 %v759
  %v864 = vunpack.c.l.b16 %v760
  %v865 = vunpack.c.l.b16 %v761
  %v866 = vunpack.c.l.b16 %v762
  %v867 = vunpack.c.l.b16 %v763
  %v868 = vunpack.c.l.b16 %v764
  %v869 = vunpack.c.l.b16 %v765
  %v870 = vunpack.c.l.b16 %v766
  %v871 = vunpack.c.l.b16 %v767
  %v872 = vunpack.c.l.b16 %v768
  %v873 = vunpack.c.l.b16 %v769
  %v874 = vunpack.c.l.b16 %v770
  %v875 = vunpack.c.l.b16 %v771
  %v876 = vunpack.c.l.b16 %v772
  %v877 = vunpack.c.l.b16 %v773
  %v878 = vunpack.c.l.b16 %v774
  %v879 = vunpack.c.l.b16 %v775
  %v880 = vpack.c.b16 %v833, %v832
  %v881 = vpack.c.b16 %v835, %v834
  %v882 = vpack.c.b16 %v837, %v836
  %v883 = vpack.c.b16 %v839, %v838
  %v884 = vpack.c.b16 %v841, %v840
  %v885 = vpack.c.b16 %v843, %v842
  %v886 = vpack.c.b16 %v845, %v844
  %v887 = vpack.c.b16 %v847, %v846
  %v888 = vpack.c.b16 %v849, %v848
  %v889 = vpack.c.b16 %v851, %v850
  %v890 = vpack.c.b16 %v853, %v852
  %v891 = vpack.c.b16 %v855, %v854
  %v892 = vpack.c.b16 %v857, %v856
  %v893 = vpack.c.b16 %v859, %v858
  %v894 = vpack.c.b16 %v861, %v860
  %v895 = vpack.c.b16 %v863, %v862
  %v896 = vpack.c.b16 %v865, %v864
  %v897 = vpack.c.b16 %v867, %v866
  %v898 = vpack.c.b16 %v869, %v868
  %v899 = vpack.c.b16 %v871, %v870
  %v900 = vpack.c.b16 %v873, %v872
  %v901 = vpack.c.b16 %v875, %v874
  %v902 = vpack.c.b16 %v877, %v876
  %v903 = vpack.c.b16 %v879, %v878
  %928 = vmatprep.subr.bf16.mxu0 0
  %929 = vmatpush1.bf16.msra.mxu0 %v887
  %930 = vmatprep.subr.bf16.mxu0 0
  %931 = vmatpush1.bf16.msra.mxu0 %v886
  %932 = vmatprep.subr.bf16.mxu0 0
  %933 = vmatpush1.bf16.msra.mxu0 %v885
  %934 = vmatprep.subr.bf16.mxu0 0
  %935 = vmatpush1.bf16.msra.mxu0 %v884
  %936 = vmatprep.subr.bf16.mxu0 0
  %937 = vmatpush1.bf16.msra.mxu0 %v883
  %938 = vmatprep.subr.bf16.mxu0 0
  %939 = vmatpush1.bf16.msra.mxu0 %v882
  %940 = vmatprep.subr.bf16.mxu0 0
  %941 = vmatpush1.bf16.msra.mxu0 %v881
  %942 = vmatprep.subr.bf16.mxu0 0
  %943 = vmatpush1.bf16.msra.mxu0 %v880
  %944 = vmatprep.subr.bf16.mxu0 0
  %945 = vmatpush2.bf16.msra.mxu0 %v895
  %946 = vmatprep.subr.bf16.mxu0 0
  %947 = vmatpush2.bf16.msra.mxu0 %v894
  %948 = vmatprep.subr.bf16.mxu0 0
  %949 = vmatpush2.bf16.msra.mxu0 %v893
  %950 = vmatprep.subr.bf16.mxu0 0
  %951 = vmatpush2.bf16.msra.mxu0 %v892
  %952 = vmatprep.subr.bf16.mxu0 0
  %953 = vmatpush2.bf16.msra.mxu0 %v891
  %954 = vmatprep.subr.bf16.mxu0 0
  %955 = vmatpush2.bf16.msra.mxu0 %v890
  %956 = vmatprep.subr.bf16.mxu0 0
  %957 = vmatpush2.bf16.msra.mxu0 %v889
  %958 = vmatprep.subr.bf16.mxu0 0
  %959 = vmatpush2.bf16.msra.mxu0 %v888
  %960 = vmatprep.mubr.bf16.mxu0 %v701
  %961 = vmatmul.mubr.bf16.gmra.mxu0 %v681
  %v962 = vpop.f32.mrf.mxu0
  %v963 = vadd.f32 %v782, %v962
  %v964 = vpop.f32.mrf.mxu0
  %v965 = vpop.f32.mrf.mxu0
  %v966 = vadd.f32 %v782, %v965
  %v967 = vpop.f32.mrf.mxu0
  %968 = vmatprep.mubr.bf16.mxu0 %v709
  %969 = vmatmul.mubr.bf16.gmra.mxu0 %v682
  %v970 = vpop.f32.mrf.mxu0
  %v971 = vadd.f32 %v782, %v970
  %v972 = vpop.f32.mrf.mxu0
  %v973 = vpop.f32.mrf.mxu0
  %v974 = vadd.f32 %v782, %v973
  %v975 = vpop.f32.mrf.mxu0
  %976 = vmatprep.mubr.bf16.mxu0 %v712
  %977 = vmatmul.mubr.bf16.gmra.mxu0 %v683
  %v978 = vpop.f32.mrf.mxu0
  %v979 = vadd.f32 %v782, %v978
  %v980 = vpop.f32.mrf.mxu0
  %v981 = vpop.f32.mrf.mxu0
  %v982 = vpop.f32.mrf.mxu0
  %983 = vdwg.mxu0
  %984 = vmatprep.subr.bf16.mxu0 0
  %985 = vmatpush1.bf16.msra.mxu0 %v903
  %986 = vmatprep.subr.bf16.mxu0 0
  %987 = vmatpush1.bf16.msra.mxu0 %v902
  %988 = vmatprep.subr.bf16.mxu0 0
  %989 = vmatpush1.bf16.msra.mxu0 %v901
  %990 = vmatprep.subr.bf16.mxu0 0
  %991 = vmatpush1.bf16.msra.mxu0 %v900
  %992 = vmatprep.subr.bf16.mxu0 0
  %993 = vmatpush1.bf16.msra.mxu0 %v899
  %994 = vmatprep.subr.bf16.mxu0 0
  %995 = vmatpush1.bf16.msra.mxu0 %v898
  %996 = vmatprep.subr.bf16.mxu0 0
  %997 = vmatpush1.bf16.msra.mxu0 %v897
  %998 = vmatprep.subr.bf16.mxu0 0
  %999 = vmatpush1.bf16.msra.mxu0 %v896
  %1000 = vmatprep.subr.bf16.mxu0 0
  %1001 = vmatpush2.bf16.msra.mxu0 0
  %1002 = vmatprep.subr.bf16.mxu0 0
  %1003 = vmatpush2.bf16.msra.mxu0 0
  %1004 = vmatprep.subr.bf16.mxu0 0
  %1005 = vmatpush2.bf16.msra.mxu0 0
  %1006 = vmatprep.subr.bf16.mxu0 0
  %1007 = vmatpush2.bf16.msra.mxu0 0
  %1008 = vmatprep.subr.bf16.mxu0 0
  %1009 = vmatpush2.bf16.msra.mxu0 0
  %1010 = vmatprep.subr.bf16.mxu0 0
  %1011 = vmatpush2.bf16.msra.mxu0 0
  %1012 = vmatprep.subr.bf16.mxu0 0
  %1013 = vmatpush2.bf16.msra.mxu0 0
  %1014 = vmatprep.subr.bf16.mxu0 0
  %1015 = vmatpush2.bf16.msra.mxu0 0
  %1016 = vmatprep.mubr.bf16.mxu0 0
  %1017 = vmatmul.mubr.bf16.gmra.mxu0 %v721
  %v1018 = vpop.f32.mrf.mxu0
  %v1019 = vadd.f32 %v963, %v1018
  %v1020 = vpop.f32.mrf.mxu0
  %v1021 = vpop.f32.mrf.mxu0
  %v1022 = vadd.f32 %v966, %v1021
  %v1023 = vpop.f32.mrf.mxu0
  %1024 = vmatprep.mubr.bf16.mxu0 0
  %1025 = vmatmul.mubr.bf16.gmra.mxu0 %v723
  %v1026 = vpop.f32.mrf.mxu0
  %v1027 = vadd.f32 %v971, %v1026
  %v1028 = vpop.f32.mrf.mxu0
  %v1029 = vpop.f32.mrf.mxu0
  %v1030 = vadd.f32 %v974, %v1029
  %v1031 = vpop.f32.mrf.mxu0
  %1032 = vmatprep.mubr.bf16.mxu0 0
  %1033 = vmatmul.mubr.bf16.gmra.mxu0 %v722
  %v1034 = vpop.f32.mrf.mxu0
  %v1035 = vadd.f32 %v979, %v1034
  %v1036 = vpop.f32.mrf.mxu0
  %v1037 = vpop.f32.mrf.mxu0
  %v1038 = vpop.f32.mrf.mxu0
  %1039 = vdwg.mxu0
  %v1040 = vmax.f32 %v1019, 0.0
  %v1041 = vmax.f32 %v1022, 0.0
  %v1042 = vmax.f32 %v1027, 0.0
  %v1043 = vmax.f32 %v1030, 0.0
  %v1044 = vmax.f32 %v1035, 0.0
  %v1045 = vmul.f32 %v1040, %v134
  %v1046 = vmul.f32 %v1041, %v135
  %v1047 = vmul.f32 %v1042, %v136
  %v1048 = vmul.f32 %v1043, %v137
  %v1049 = vmul.f32 %v1044, %v138
  %v1050 = vld [vmem:[#allocation3] sm:$0xf]
  %v1051 = vld [vmem:[#allocation3 + $0x4] sm:$0xf]
  %v1052 = vld [vmem:[#allocation3 + $0x8] sm:$0xf]
  %v1053 = vld [vmem:[#allocation3 + $0xc] sm:$0xf]
  %v1054 = vld [vmem:[#allocation3 + $0x10] sm:$0x1]
  %v1055 = vunpack.c.l.bf16 %v1050
  %v1056 = vunpack.c.l.bf16 %v1051
  %v1057 = vunpack.c.l.bf16 %v1052
  %v1058 = vunpack.c.l.bf16 %v1053
  %v1059 = vunpack.c.l.bf16 %v1054
  %v1060 = vadd.f32 %v1045, %v1055
  %v1061 = vadd.f32 %v1046, %v1056
  %v1062 = vadd.f32 %v1047, %v1057
  %v1063 = vadd.f32 %v1048, %v1058
  %v1064 = vadd.f32 %v1049, %v1059
  %v1065 = vpack.c.bf16 %v1061, %v1060
  %v1066 = vpack.c.bf16 %v1063, %v1062
  %v1067 = vpack.c.bf16 %v1064, %v1064
  %v1071 = vunpack.c.l.b16 %v1065
  %v1072 = vunpack.c.h.b16 %v1065
  %v1073 = vunpack.c.l.b16 %v1066
  %v1074 = vunpack.c.h.b16 %v1066
  %v1075 = vunpack.c.l.b16 %v1067
  %v1076 = vpack.c.b16 %v1071, %v1071
  %v1077 = vpack.c.b16 %v1072, %v1072
  %v1078 = vpack.c.b16 %v1073, %v1073
  %v1079 = vpack.c.b16 %v1074, %v1074
  %v1080 = vpack.c.b16 %v1075, %v1075
  %v1082 = vshrl.u32 %v1076, 16
  %v1084 = vrot.slane %v1082, 7
  %v1085 = vshll.u32 %v1076, 16
  %v1087 = vor.u32 %v1084, %v1085
  %v1088 = vrot.slane %v1084, 4
  %v1090 = vshrl.u32 %v1077, 16
  %v1092 = vrot.slane %v1090, 7
  %v1093 = vshll.u32 %v1077, 16
  %v1095 = vor.u32 %v1092, %v1093
  %v1096 = vsel %vm34, %v1088, %v1095
  %v1097 = vrot.slane %v1092, 4
  %v1099 = vshrl.u32 %v1078, 16
  %v1101 = vrot.slane %v1099, 7
  %v1102 = vshll.u32 %v1078, 16
  %v1104 = vor.u32 %v1101, %v1102
  %v1105 = vsel %vm34, %v1097, %v1104
  %v1106 = vrot.slane %v1101, 4
  %v1108 = vshrl.u32 %v1079, 16
  %v1110 = vrot.slane %v1108, 7
  %v1111 = vshll.u32 %v1079, 16
  %v1113 = vor.u32 %v1110, %v1111
  %v1114 = vsel %vm34, %v1106, %v1113
  %v1115 = vrot.slane %v1110, 4
  %v1117 = vshrl.u32 %v1080, 16
  %v1119 = vrot.slane %v1117, 7
  %v1120 = vshll.u32 %v1080, 16
  %v1122 = vor.u32 %v1119, %v1120
  %v1123 = vsel %vm34, %v1115, %v1122
  %v1129 = vsel %vm57, %v1087, %v664
  %1130 = vst [vmem:[#allocation2] sm:$0xf] %v1129
  %1131 = vst [vmem:[#allocation2 + $0x4] sm:$0xf] %v1096
  %1132 = vst [vmem:[#allocation2 + $0x8] sm:$0xf] %v1105
  %1133 = vst [vmem:[#allocation2 + $0xc] sm:$0xf] %v1114
  %v1134 = vld [vmem:[#allocation2 + $0x10] sm:$0x3]
  %v1135 = vsel %vm109, %v1123, %v1134
  %1136 = vst [vmem:[#allocation2 + $0x10] sm:$0x3] %v1135
  %v1137 = vld [vmem:[#allocation2] sm:$0xf]
  %v1138 = vld [vmem:[#allocation2 + $0x4] sm:$0xf]
  %v1139 = vld [vmem:[#allocation2 + $0x8] sm:$0xf]
  %v1140 = vld [vmem:[#allocation2 + $0xc] sm:$0xf]
  %v1141 = vld [vmem:[#allocation2 + $0x10] sm:$0x3]
  %v1143 = vshrl.u32 %v1137, 16
  %v1145 = vrot.slane %v1143, 4
  %v1146 = vshll.u32 %v1137, 16
  %v1148 = vrot.slane %v1146, 5
  %v1149 = vor.u32 %v1145, %v1148
  %v1150 = vrot.slane %v1149, 4
  %v1152 = vshll.u32 %v1138, 16
  %v1154 = vrot.slane %v1152, 5
  %v1155 = vsel %vm146, %v1150, %v1154
  %v1156 = vshrl.u32 %v1138, 16
  %v1158 = vrot.slane %v1156, 4
  %v1159 = vor.u32 %v1158, %v1154
  %v1160 = vrot.slane %v1159, 4
  %v1162 = vshll.u32 %v1139, 16
  %v1164 = vrot.slane %v1162, 5
  %v1165 = vsel %vm146, %v1160, %v1164
  %v1166 = vshrl.u32 %v1139, 16
  %v1168 = vrot.slane %v1166, 4
  %v1169 = vor.u32 %v1168, %v1164
  %v1170 = vrot.slane %v1169, 4
  %v1172 = vshll.u32 %v1140, 16
  %v1174 = vrot.slane %v1172, 5
  %v1175 = vsel %vm146, %v1170, %v1174
  %v1176 = vshrl.u32 %v1140, 16
  %v1178 = vrot.slane %v1176, 4
  %v1179 = vor.u32 %v1178, %v1174
  %v1180 = vrot.slane %v1179, 4
  %v1182 = vshll.u32 %v1141, 16
  %v1184 = vrot.slane %v1182, 5
  %v1185 = vsel %vm146, %v1180, %v1184
  %v1186 = vshrl.u32 %v1141, 16
  %v1188 = vrot.slane %v1186, 4
  %v1189 = vor.u32 %v1188, %v1184
  %v1190 = vrot.slane %v1189, 4
  %1196 = vst [vmem:[#allocation3] sm:$0xf] %v1155
  %1197 = vst [vmem:[#allocation3 + $0x4] sm:$0xf] %v1165
  %1198 = vst [vmem:[#allocation3 + $0x8] sm:$0xf] %v1175
  %1199 = vst [vmem:[#allocation3 + $0xc] sm:$0xf] %v1185
  %1200 = vst [vmem:[#allocation3 + $0x10] sm:$0x1] %v1190
  %v1201 = vld [vmem:[#allocation2] sm:$0xf]
  %v1202 = vld [vmem:[#allocation2 + $0x4] sm:$0xf]
  %v1203 = vld [vmem:[#allocation2 + $0x8] sm:$0xf]
  %v1204 = vld [vmem:[#allocation2 + $0xc] sm:$0xf]
  %v1205 = vld [vmem:[#allocation2 + $0x10] sm:$0x1]
  %v1206 = vld [vmem:[#allocation2 + $0x10] sm:$0x3]
  %v1207 = vld [vmem:[#allocation2] sm:$0xe]
  %v1213 = vunpack.c.l.b16 %v1201
  %v1214 = vunpack.c.l.b16 %v1202
  %v1215 = vunpack.c.l.b16 %v1203
  %v1216 = vunpack.c.l.b16 %v1204
  %v1217 = vunpack.c.l.b16 %v1205
  %v1218 = vpack.c.b16 %v1214, %v1213
  %v1219 = vpack.c.b16 %v1216, %v1215
  %v1220 = vpack.c.b16 %v1217, %v1217
  %v1225 = vunpack.c.l.b16 %v1206
  %v1226 = vpack.c.b16 %v1225, %v1225
  %v1228 = vshrl.u32 %v1218, 16
  %v1230 = vshll.u32 %v1218, 16
  %v1232 = vrot.slane %v1230, 1
  %v1233 = vor.u32 %v1228, %v1232
  %v1235 = vshll.u32 %v1219, 16
  %v1237 = vrot.slane %v1235, 1
  %v1238 = vsel %vm232, %v1233, %v1237
  %v1239 = vshrl.u32 %v1219, 16
  %v1241 = vor.u32 %v1239, %v1237
  %v1243 = vshll.u32 %v1226, 16
  %v1245 = vrot.slane %v1243, 1
  %v1246 = vsel %vm232, %v1241, %v1245
  %v1247 = vshrl.u32 %v1226, 16
  %v1249 = vor.u32 %v1247, %v1245
  %v1254 = vunpack.c.l.b16 %v1207
  %v1255 = vpack.c.b16 %v1214, %v1254
  %v1256 = vrot.slane %v1255, 1
  %v1257 = vrot.slane %v1219, 1
  %v1258 = vsel %vm262, %v1256, %v1257
  %v1259 = vrot.slane %v1226, 1
  %v1260 = vsel %vm262, %v1257, %v1259
  %s1264 = scalar_lea.vmem %s1, 384
  %v1265 = vld [vmem:[%s1264] sm:$0xf]
  %v1266 = vld [vmem:[%s1264 + $0x4] sm:$0xf]
  %v1267 = vld [vmem:[%s1264 + $0x8] sm:$0xf]
  %v1268 = vld [vmem:[%s1264 + $0xc] sm:$0xf]
  %v1269 = vld [vmem:[%s1264 + $0x10] sm:$0xf]
  %v1270 = vld [vmem:[%s1264 + $0x14] sm:$0xf]
  %v1271 = vld [vmem:[%s1264 + $0x18] sm:$0xf]
  %v1272 = vld [vmem:[%s1264 + $0x1c] sm:$0xf]
  %v1273 = vld [vmem:[%s1264 + $0x20] sm:$0xf]
  %v1274 = vld [vmem:[%s1264 + $0x24] sm:$0xf]
  %v1275 = vld [vmem:[%s1264 + $0x28] sm:$0xf]
  %v1276 = vld [vmem:[%s1264 + $0x2c] sm:$0xf]
  %v1277 = vld [vmem:[%s1264 + $0x30] sm:$0xf]
  %v1278 = vld [vmem:[%s1264 + $0x34] sm:$0xf]
  %v1279 = vld [vmem:[%s1264 + $0x38] sm:$0xf]
  %v1280 = vld [vmem:[%s1264 + $0x3c] sm:$0xf]
  %v1281 = vld [vmem:[%s1264 + $0x40] sm:$0xf]
  %v1282 = vld [vmem:[%s1264 + $0x44] sm:$0xf]
  %v1283 = vld [vmem:[%s1264 + $0x48] sm:$0xf]
  %v1284 = vld [vmem:[%s1264 + $0x4c] sm:$0xf]
  %v1285 = vld [vmem:[%s1264 + $0x50] sm:$0xf]
  %v1286 = vld [vmem:[%s1264 + $0x54] sm:$0xf]
  %v1287 = vld [vmem:[%s1264 + $0x58] sm:$0xf]
  %v1288 = vld [vmem:[%s1264 + $0x5c] sm:$0xf]
  %v1289 = vld [vmem:[%s1264 + $0x60] sm:$0xf]
  %v1290 = vld [vmem:[%s1264 + $0x64] sm:$0xf]
  %v1291 = vld [vmem:[%s1264 + $0x68] sm:$0xf]
  %v1292 = vld [vmem:[%s1264 + $0x6c] sm:$0xf]
  %v1293 = vld [vmem:[%s1264 + $0x70] sm:$0xf]
  %v1294 = vld [vmem:[%s1264 + $0x74] sm:$0xf]
  %v1295 = vld [vmem:[%s1264 + $0x78] sm:$0xf]
  %v1296 = vld [vmem:[%s1264 + $0x7c] sm:$0xf]
  %v1297 = vld [vmem:[%s1264 + $0x80] sm:$0xf]
  %v1298 = vld [vmem:[%s1264 + $0x84] sm:$0xf]
  %v1299 = vld [vmem:[%s1264 + $0x88] sm:$0xf]
  %v1300 = vld [vmem:[%s1264 + $0x8c] sm:$0xf]
  %v1301 = vld [vmem:[%s1264 + $0x90] sm:$0xf]
  %v1302 = vld [vmem:[%s1264 + $0x94] sm:$0xf]
  %v1303 = vld [vmem:[%s1264 + $0x98] sm:$0xf]
  %v1304 = vld [vmem:[%s1264 + $0x9c] sm:$0xf]
  %v1305 = vld [vmem:[%s1264 + $0xa0] sm:$0xf]
  %v1306 = vld [vmem:[%s1264 + $0xa4] sm:$0xf]
  %v1307 = vld [vmem:[%s1264 + $0xa8] sm:$0xf]
  %v1308 = vld [vmem:[%s1264 + $0xac] sm:$0xf]
  %v1309 = vld [vmem:[%s1264 + $0xb0] sm:$0xf]
  %v1310 = vld [vmem:[%s1264 + $0xb4] sm:$0xf]
  %v1311 = vld [vmem:[%s1264 + $0xb8] sm:$0xf]
  %v1312 = vld [vmem:[%s1264 + $0xbc] sm:$0xf]
  %s1313 = scalar_lea.vmem %s2, 2
  %v1314 = vld [vmem:[%s1313] sm:$0x1]
  %v1316 = vlaneseq
  %v1317 = vshrl.u32 %v1316, 7
  %v1318 = vsub.s32 0, %v1317
  %v1319 = vrot.slane %v1314, %v1318
  %v1369 = vunpack.c.l.b16 %v1265
  %v1370 = vunpack.c.l.b16 %v1266
  %v1371 = vunpack.c.l.b16 %v1267
  %v1372 = vunpack.c.l.b16 %v1268
  %v1373 = vunpack.c.l.b16 %v1269
  %v1374 = vunpack.c.l.b16 %v1270
  %v1375 = vunpack.c.l.b16 %v1271
  %v1376 = vunpack.c.l.b16 %v1272
  %v1377 = vunpack.c.l.b16 %v1273
  %v1378 = vunpack.c.l.b16 %v1274
  %v1379 = vunpack.c.l.b16 %v1275
  %v1380 = vunpack.c.l.b16 %v1276
  %v1381 = vunpack.c.l.b16 %v1277
  %v1382 = vunpack.c.l.b16 %v1278
  %v1383 = vunpack.c.l.b16 %v1279
  %v1384 = vunpack.c.l.b16 %v1280
  %v1385 = vunpack.c.l.b16 %v1281
  %v1386 = vunpack.c.l.b16 %v1282
  %v1387 = vunpack.c.l.b16 %v1283
  %v1388 = vunpack.c.l.b16 %v1284
  %v1389 = vunpack.c.l.b16 %v1285
  %v1390 = vunpack.c.l.b16 %v1286
  %v1391 = vunpack.c.l.b16 %v1287
  %v1392 = vunpack.c.l.b16 %v1288
  %v1393 = vunpack.c.l.b16 %v1289
  %v1394 = vunpack.c.l.b16 %v1290
  %v1395 = vunpack.c.l.b16 %v1291
  %v1396 = vunpack.c.l.b16 %v1292
  %v1397 = vunpack.c.l.b16 %v1293
  %v1398 = vunpack.c.l.b16 %v1294
  %v1399 = vunpack.c.l.b16 %v1295
  %v1400 = vunpack.c.l.b16 %v1296
  %v1401 = vunpack.c.l.b16 %v1297
  %v1402 = vunpack.c.l.b16 %v1298
  %v1403 = vunpack.c.l.b16 %v1299
  %v1404 = vunpack.c.l.b16 %v1300
  %v1405 = vunpack.c.l.b16 %v1301
  %v1406 = vunpack.c.l.b16 %v1302
  %v1407 = vunpack.c.l.b16 %v1303
  %v1408 = vunpack.c.l.b16 %v1304
  %v1409 = vunpack.c.l.b16 %v1305
  %v1410 = vunpack.c.l.b16 %v1306
  %v1411 = vunpack.c.l.b16 %v1307
  %v1412 = vunpack.c.l.b16 %v1308
  %v1413 = vunpack.c.l.b16 %v1309
  %v1414 = vunpack.c.l.b16 %v1310
  %v1415 = vunpack.c.l.b16 %v1311
  %v1416 = vunpack.c.l.b16 %v1312
  %v1417 = vpack.c.b16 %v1370, %v1369
  %v1418 = vpack.c.b16 %v1372, %v1371
  %v1419 = vpack.c.b16 %v1374, %v1373
  %v1420 = vpack.c.b16 %v1376, %v1375
  %v1421 = vpack.c.b16 %v1378, %v1377
  %v1422 = vpack.c.b16 %v1380, %v1379
  %v1423 = vpack.c.b16 %v1382, %v1381
  %v1424 = vpack.c.b16 %v1384, %v1383
  %v1425 = vpack.c.b16 %v1386, %v1385
  %v1426 = vpack.c.b16 %v1388, %v1387
  %v1427 = vpack.c.b16 %v1390, %v1389
  %v1428 = vpack.c.b16 %v1392, %v1391
  %v1429 = vpack.c.b16 %v1394, %v1393
  %v1430 = vpack.c.b16 %v1396, %v1395
  %v1431 = vpack.c.b16 %v1398, %v1397
  %v1432 = vpack.c.b16 %v1400, %v1399
  %v1433 = vpack.c.b16 %v1402, %v1401
  %v1434 = vpack.c.b16 %v1404, %v1403
  %v1435 = vpack.c.b16 %v1406, %v1405
  %v1436 = vpack.c.b16 %v1408, %v1407
  %v1437 = vpack.c.b16 %v1410, %v1409
  %v1438 = vpack.c.b16 %v1412, %v1411
  %v1439 = vpack.c.b16 %v1414, %v1413
  %v1440 = vpack.c.b16 %v1416, %v1415
  %1465 = vmatprep.subr.bf16.mxu0 0
  %1466 = vmatpush1.bf16.msra.mxu0 %v1424
  %1467 = vmatprep.subr.bf16.mxu0 0
  %1468 = vmatpush1.bf16.msra.mxu0 %v1423
  %1469 = vmatprep.subr.bf16.mxu0 0
  %1470 = vmatpush1.bf16.msra.mxu0 %v1422
  %1471 = vmatprep.subr.bf16.mxu0 0
  %1472 = vmatpush1.bf16.msra.mxu0 %v1421
  %1473 = vmatprep.subr.bf16.mxu0 0
  %1474 = vmatpush1.bf16.msra.mxu0 %v1420
  %1475 = vmatprep.subr.bf16.mxu0 0
  %1476 = vmatpush1.bf16.msra.mxu0 %v1419
  %1477 = vmatprep.subr.bf16.mxu0 0
  %1478 = vmatpush1.bf16.msra.mxu0 %v1418
  %1479 = vmatprep.subr.bf16.mxu0 0
  %1480 = vmatpush1.bf16.msra.mxu0 %v1417
  %1481 = vmatprep.subr.bf16.mxu0 0
  %1482 = vmatpush2.bf16.msra.mxu0 %v1432
  %1483 = vmatprep.subr.bf16.mxu0 0
  %1484 = vmatpush2.bf16.msra.mxu0 %v1431
  %1485 = vmatprep.subr.bf16.mxu0 0
  %1486 = vmatpush2.bf16.msra.mxu0 %v1430
  %1487 = vmatprep.subr.bf16.mxu0 0
  %1488 = vmatpush2.bf16.msra.mxu0 %v1429
  %1489 = vmatprep.subr.bf16.mxu0 0
  %1490 = vmatpush2.bf16.msra.mxu0 %v1428
  %1491 = vmatprep.subr.bf16.mxu0 0
  %1492 = vmatpush2.bf16.msra.mxu0 %v1427
  %1493 = vmatprep.subr.bf16.mxu0 0
  %1494 = vmatpush2.bf16.msra.mxu0 %v1426
  %1495 = vmatprep.subr.bf16.mxu0 0
  %1496 = vmatpush2.bf16.msra.mxu0 %v1425
  %1497 = vmatprep.mubr.bf16.mxu0 %v1238
  %1498 = vmatmul.mubr.bf16.gmra.mxu0 %v1218
  %v1499 = vpop.f32.mrf.mxu0
  %v1500 = vadd.f32 %v1319, %v1499
  %v1501 = vpop.f32.mrf.mxu0
  %v1502 = vpop.f32.mrf.mxu0
  %v1503 = vadd.f32 %v1319, %v1502
  %v1504 = vpop.f32.mrf.mxu0
  %1505 = vmatprep.mubr.bf16.mxu0 %v1246
  %1506 = vmatmul.mubr.bf16.gmra.mxu0 %v1219
  %v1507 = vpop.f32.mrf.mxu0
  %v1508 = vadd.f32 %v1319, %v1507
  %v1509 = vpop.f32.mrf.mxu0
  %v1510 = vpop.f32.mrf.mxu0
  %v1511 = vadd.f32 %v1319, %v1510
  %v1512 = vpop.f32.mrf.mxu0
  %1513 = vmatprep.mubr.bf16.mxu0 %v1249
  %1514 = vmatmul.mubr.bf16.gmra.mxu0 %v1220
  %v1515 = vpop.f32.mrf.mxu0
  %v1516 = vadd.f32 %v1319, %v1515
  %v1517 = vpop.f32.mrf.mxu0
  %v1518 = vpop.f32.mrf.mxu0
  %v1519 = vpop.f32.mrf.mxu0
  %1520 = vdwg.mxu0
  %1521 = vmatprep.subr.bf16.mxu0 0
  %1522 = vmatpush1.bf16.msra.mxu0 %v1440
  %1523 = vmatprep.subr.bf16.mxu0 0
  %1524 = vmatpush1.bf16.msra.mxu0 %v1439
  %1525 = vmatprep.subr.bf16.mxu0 0
  %1526 = vmatpush1.bf16.msra.mxu0 %v1438
  %1527 = vmatprep.subr.bf16.mxu0 0
  %1528 = vmatpush1.bf16.msra.mxu0 %v1437
  %1529 = vmatprep.subr.bf16.mxu0 0
  %1530 = vmatpush1.bf16.msra.mxu0 %v1436
  %1531 = vmatprep.subr.bf16.mxu0 0
  %1532 = vmatpush1.bf16.msra.mxu0 %v1435
  %1533 = vmatprep.subr.bf16.mxu0 0
  %1534 = vmatpush1.bf16.msra.mxu0 %v1434
  %1535 = vmatprep.subr.bf16.mxu0 0
  %1536 = vmatpush1.bf16.msra.mxu0 %v1433
  %1537 = vmatprep.subr.bf16.mxu0 0
  %1538 = vmatpush2.bf16.msra.mxu0 0
  %1539 = vmatprep.subr.bf16.mxu0 0
  %1540 = vmatpush2.bf16.msra.mxu0 0
  %1541 = vmatprep.subr.bf16.mxu0 0
  %1542 = vmatpush2.bf16.msra.mxu0 0
  %1543 = vmatprep.subr.bf16.mxu0 0
  %1544 = vmatpush2.bf16.msra.mxu0 0
  %1545 = vmatprep.subr.bf16.mxu0 0
  %1546 = vmatpush2.bf16.msra.mxu0 0
  %1547 = vmatprep.subr.bf16.mxu0 0
  %1548 = vmatpush2.bf16.msra.mxu0 0
  %1549 = vmatprep.subr.bf16.mxu0 0
  %1550 = vmatpush2.bf16.msra.mxu0 0
  %1551 = vmatprep.subr.bf16.mxu0 0
  %1552 = vmatpush2.bf16.msra.mxu0 0
  %1553 = vmatprep.mubr.bf16.mxu0 0
  %1554 = vmatmul.mubr.bf16.gmra.mxu0 %v1258
  %v1555 = vpop.f32.mrf.mxu0
  %v1556 = vadd.f32 %v1500, %v1555
  %v1557 = vpop.f32.mrf.mxu0
  %v1558 = vpop.f32.mrf.mxu0
  %v1559 = vadd.f32 %v1503, %v1558
  %v1560 = vpop.f32.mrf.mxu0
  %1561 = vmatprep.mubr.bf16.mxu0 0
  %1562 = vmatmul.mubr.bf16.gmra.mxu0 %v1260
  %v1563 = vpop.f32.mrf.mxu0
  %v1564 = vadd.f32 %v1508, %v1563
  %v1565 = vpop.f32.mrf.mxu0
  %v1566 = vpop.f32.mrf.mxu0
  %v1567 = vadd.f32 %v1511, %v1566
  %v1568 = vpop.f32.mrf.mxu0
  %1569 = vmatprep.mubr.bf16.mxu0 0
  %1570 = vmatmul.mubr.bf16.gmra.mxu0 %v1259
  %v1571 = vpop.f32.mrf.mxu0
  %v1572 = vadd.f32 %v1516, %v1571
  %v1573 = vpop.f32.mrf.mxu0
  %v1574 = vpop.f32.mrf.mxu0
  %v1575 = vpop.f32.mrf.mxu0
  %1576 = vdwg.mxu0
  %v1577 = vmax.f32 %v1556, 0.0
  %v1578 = vmax.f32 %v1559, 0.0
  %v1579 = vmax.f32 %v1564, 0.0
  %v1580 = vmax.f32 %v1567, 0.0
  %v1581 = vmax.f32 %v1572, 0.0
  %v1582 = vmul.f32 %v1577, %v134
  %v1583 = vmul.f32 %v1578, %v135
  %v1584 = vmul.f32 %v1579, %v136
  %v1585 = vmul.f32 %v1580, %v137
  %v1586 = vmul.f32 %v1581, %v138
  %v1587 = vpack.c.bf16 %v1583, %v1582
  %v1588 = vpack.c.bf16 %v1585, %v1584
  %v1589 = vpack.c.bf16 %v1586, %v1586
  %v1593 = vunpack.c.l.b16 %v1587
  %v1594 = vunpack.c.h.b16 %v1587
  %v1595 = vunpack.c.l.b16 %v1588
  %v1596 = vunpack.c.h.b16 %v1588
  %v1597 = vunpack.c.l.b16 %v1589
  %v1598 = vpack.c.b16 %v1593, %v1593
  %v1599 = vpack.c.b16 %v1594, %v1594
  %v1600 = vpack.c.b16 %v1595, %v1595
  %v1601 = vpack.c.b16 %v1596, %v1596
  %v1602 = vpack.c.b16 %v1597, %v1597
  %v1604 = vshrl.u32 %v1598, 16
  %v1606 = vrot.slane %v1604, 7
  %v1607 = vshll.u32 %v1598, 16
  %v1609 = vor.u32 %v1606, %v1607
  %v1610 = vrot.slane %v1606, 4
  %v1612 = vshrl.u32 %v1599, 16
  %v1614 = vrot.slane %v1612, 7
  %v1615 = vshll.u32 %v1599, 16
  %v1617 = vor.u32 %v1614, %v1615
  %v1618 = vsel %vm34, %v1610, %v1617
  %v1619 = vrot.slane %v1614, 4
  %v1621 = vshrl.u32 %v1600, 16
  %v1623 = vrot.slane %v1621, 7
  %v1624 = vshll.u32 %v1600, 16
  %v1626 = vor.u32 %v1623, %v1624
  %v1627 = vsel %vm34, %v1619, %v1626
  %v1628 = vrot.slane %v1623, 4
  %v1630 = vshrl.u32 %v1601, 16
  %v1632 = vrot.slane %v1630, 7
  %v1633 = vshll.u32 %v1601, 16
  %v1635 = vor.u32 %v1632, %v1633
  %v1636 = vsel %vm34, %v1628, %v1635
  %v1637 = vrot.slane %v1632, 4
  %v1639 = vshrl.u32 %v1602, 16
  %v1641 = vrot.slane %v1639, 7
  %v1642 = vshll.u32 %v1602, 16
  %v1644 = vor.u32 %v1641, %v1642
  %v1645 = vsel %vm34, %v1637, %v1644
  %v1651 = vsel %vm57, %v1609, %v1201
  %1652 = vst [vmem:[#allocation2] sm:$0xf] %v1651
  %1653 = vst [vmem:[#allocation2 + $0x4] sm:$0xf] %v1618
  %1654 = vst [vmem:[#allocation2 + $0x8] sm:$0xf] %v1627
  %1655 = vst [vmem:[#allocation2 + $0xc] sm:$0xf] %v1636
  %v1656 = vld [vmem:[#allocation2 + $0x10] sm:$0x3]
  %v1657 = vsel %vm109, %v1645, %v1656
  %1658 = vst [vmem:[#allocation2 + $0x10] sm:$0x3] %v1657
  %v1659 = vld [vmem:[#allocation2] sm:$0xf]
  %v1660 = vld [vmem:[#allocation2 + $0x4] sm:$0xf]
  %v1661 = vld [vmem:[#allocation2 + $0x8] sm:$0xf]
  %v1662 = vld [vmem:[#allocation2 + $0xc] sm:$0xf]
  %v1663 = vld [vmem:[#allocation2 + $0x10] sm:$0x1]
  %v1664 = vld [vmem:[#allocation2 + $0x10] sm:$0x3]
  %v1665 = vld [vmem:[#allocation2] sm:$0xe]
  %v1671 = vunpack.c.l.b16 %v1659
  %v1672 = vunpack.c.l.b16 %v1660
  %v1673 = vunpack.c.l.b16 %v1661
  %v1674 = vunpack.c.l.b16 %v1662
  %v1675 = vunpack.c.l.b16 %v1663
  %v1676 = vpack.c.b16 %v1672, %v1671
  %v1677 = vpack.c.b16 %v1674, %v1673
  %v1678 = vpack.c.b16 %v1675, %v1675
  %v1683 = vunpack.c.l.b16 %v1664
  %v1684 = vpack.c.b16 %v1683, %v1683
  %v1686 = vshrl.u32 %v1676, 16
  %v1688 = vshll.u32 %v1676, 16
  %v1690 = vrot.slane %v1688, 1
  %v1691 = vor.u32 %v1686, %v1690
  %v1693 = vshll.u32 %v1677, 16
  %v1695 = vrot.slane %v1693, 1
  %v1696 = vsel %vm232, %v1691, %v1695
  %v1697 = vshrl.u32 %v1677, 16
  %v1699 = vor.u32 %v1697, %v1695
  %v1701 = vshll.u32 %v1684, 16
  %v1703 = vrot.slane %v1701, 1
  %v1704 = vsel %vm232, %v1699, %v1703
  %v1705 = vshrl.u32 %v1684, 16
  %v1707 = vor.u32 %v1705, %v1703
  %v1712 = vunpack.c.l.b16 %v1665
  %v1713 = vpack.c.b16 %v1672, %v1712
  %v1714 = vrot.slane %v1713, 1
  %v1715 = vrot.slane %v1677, 1
  %v1716 = vsel %vm262, %v1714, %v1715
  %v1717 = vrot.slane %v1684, 1
  %v1718 = vsel %vm262, %v1715, %v1717
  %s1722 = scalar_lea.vmem %s1, 576
  %v1723 = vld [vmem:[%s1722] sm:$0xf]
  %v1724 = vld [vmem:[%s1722 + $0x4] sm:$0xf]
  %v1725 = vld [vmem:[%s1722 + $0x8] sm:$0xf]
  %v1726 = vld [vmem:[%s1722 + $0xc] sm:$0xf]
  %v1727 = vld [vmem:[%s1722 + $0x10] sm:$0xf]
  %v1728 = vld [vmem:[%s1722 + $0x14] sm:$0xf]
  %v1729 = vld [vmem:[%s1722 + $0x18] sm:$0xf]
  %v1730 = vld [vmem:[%s1722 + $0x1c] sm:$0xf]
  %v1731 = vld [vmem:[%s1722 + $0x20] sm:$0xf]
  %v1732 = vld [vmem:[%s1722 + $0x24] sm:$0xf]
  %v1733 = vld [vmem:[%s1722 + $0x28] sm:$0xf]
  %v1734 = vld [vmem:[%s1722 + $0x2c] sm:$0xf]
  %v1735 = vld [vmem:[%s1722 + $0x30] sm:$0xf]
  %v1736 = vld [vmem:[%s1722 + $0x34] sm:$0xf]
  %v1737 = vld [vmem:[%s1722 + $0x38] sm:$0xf]
  %v1738 = vld [vmem:[%s1722 + $0x3c] sm:$0xf]
  %v1739 = vld [vmem:[%s1722 + $0x40] sm:$0xf]
  %v1740 = vld [vmem:[%s1722 + $0x44] sm:$0xf]
  %v1741 = vld [vmem:[%s1722 + $0x48] sm:$0xf]
  %v1742 = vld [vmem:[%s1722 + $0x4c] sm:$0xf]
  %v1743 = vld [vmem:[%s1722 + $0x50] sm:$0xf]
  %v1744 = vld [vmem:[%s1722 + $0x54] sm:$0xf]
  %v1745 = vld [vmem:[%s1722 + $0x58] sm:$0xf]
  %v1746 = vld [vmem:[%s1722 + $0x5c] sm:$0xf]
  %v1747 = vld [vmem:[%s1722 + $0x60] sm:$0xf]
  %v1748 = vld [vmem:[%s1722 + $0x64] sm:$0xf]
  %v1749 = vld [vmem:[%s1722 + $0x68] sm:$0xf]
  %v1750 = vld [vmem:[%s1722 + $0x6c] sm:$0xf]
  %v1751 = vld [vmem:[%s1722 + $0x70] sm:$0xf]
  %v1752 = vld [vmem:[%s1722 + $0x74] sm:$0xf]
  %v1753 = vld [vmem:[%s1722 + $0x78] sm:$0xf]
  %v1754 = vld [vmem:[%s1722 + $0x7c] sm:$0xf]
  %v1755 = vld [vmem:[%s1722 + $0x80] sm:$0xf]
  %v1756 = vld [vmem:[%s1722 + $0x84] sm:$0xf]
  %v1757 = vld [vmem:[%s1722 + $0x88] sm:$0xf]
  %v1758 = vld [vmem:[%s1722 + $0x8c] sm:$0xf]
  %v1759 = vld [vmem:[%s1722 + $0x90] sm:$0xf]
  %v1760 = vld [vmem:[%s1722 + $0x94] sm:$0xf]
  %v1761 = vld [vmem:[%s1722 + $0x98] sm:$0xf]
  %v1762 = vld [vmem:[%s1722 + $0x9c] sm:$0xf]
  %v1763 = vld [vmem:[%s1722 + $0xa0] sm:$0xf]
  %v1764 = vld [vmem:[%s1722 + $0xa4] sm:$0xf]
  %v1765 = vld [vmem:[%s1722 + $0xa8] sm:$0xf]
  %v1766 = vld [vmem:[%s1722 + $0xac] sm:$0xf]
  %v1767 = vld [vmem:[%s1722 + $0xb0] sm:$0xf]
  %v1768 = vld [vmem:[%s1722 + $0xb4] sm:$0xf]
  %v1769 = vld [vmem:[%s1722 + $0xb8] sm:$0xf]
  %v1770 = vld [vmem:[%s1722 + $0xbc] sm:$0xf]
  %s1771 = scalar_lea.vmem %s2, 3
  %v1772 = vld [vmem:[%s1771] sm:$0x1]
  %v1774 = vlaneseq
  %v1775 = vshrl.u32 %v1774, 7
  %v1776 = vsub.s32 0, %v1775
  %v1777 = vrot.slane %v1772, %v1776
  %v1827 = vunpack.c.l.b16 %v1723
  %v1828 = vunpack.c.l.b16 %v1724
  %v1829 = vunpack.c.l.b16 %v1725
  %v1830 = vunpack.c.l.b16 %v1726
  %v1831 = vunpack.c.l.b16 %v1727
  %v1832 = vunpack.c.l.b16 %v1728
  %v1833 = vunpack.c.l.b16 %v1729
  %v1834 = vunpack.c.l.b16 %v1730
  %v1835 = vunpack.c.l.b16 %v1731
  %v1836 = vunpack.c.l.b16 %v1732
  %v1837 = vunpack.c.l.b16 %v1733
  %v1838 = vunpack.c.l.b16 %v1734
  %v1839 = vunpack.c.l.b16 %v1735
  %v1840 = vunpack.c.l.b16 %v1736
  %v1841 = vunpack.c.l.b16 %v1737
  %v1842 = vunpack.c.l.b16 %v1738
  %v1843 = vunpack.c.l.b16 %v1739
  %v1844 = vunpack.c.l.b16 %v1740
  %v1845 = vunpack.c.l.b16 %v1741
  %v1846 = vunpack.c.l.b16 %v1742
  %v1847 = vunpack.c.l.b16 %v1743
  %v1848 = vunpack.c.l.b16 %v1744
  %v1849 = vunpack.c.l.b16 %v1745
  %v1850 = vunpack.c.l.b16 %v1746
  %v1851 = vunpack.c.l.b16 %v1747
  %v1852 = vunpack.c.l.b16 %v1748
  %v1853 = vunpack.c.l.b16 %v1749
  %v1854 = vunpack.c.l.b16 %v1750
  %v1855 = vunpack.c.l.b16 %v1751
  %v1856 = vunpack.c.l.b16 %v1752
  %v1857 = vunpack.c.l.b16 %v1753
  %v1858 = vunpack.c.l.b16 %v1754
  %v1859 = vunpack.c.l.b16 %v1755
  %v1860 = vunpack.c.l.b16 %v1756
  %v1861 = vunpack.c.l.b16 %v1757
  %v1862 = vunpack.c.l.b16 %v1758
  %v1863 = vunpack.c.l.b16 %v1759
  %v1864 = vunpack.c.l.b16 %v1760
  %v1865 = vunpack.c.l.b16 %v1761
  %v1866 = vunpack.c.l.b16 %v1762
  %v1867 = vunpack.c.l.b16 %v1763
  %v1868 = vunpack.c.l.b16 %v1764
  %v1869 = vunpack.c.l.b16 %v1765
  %v1870 = vunpack.c.l.b16 %v1766
  %v1871 = vunpack.c.l.b16 %v1767
  %v1872 = vunpack.c.l.b16 %v1768
  %v1873 = vunpack.c.l.b16 %v1769
  %v1874 = vunpack.c.l.b16 %v1770
  %v1875 = vpack.c.b16 %v1828, %v1827
  %v1876 = vpack.c.b16 %v1830, %v1829
  %v1877 = vpack.c.b16 %v1832, %v1831
  %v1878 = vpack.c.b16 %v1834, %v1833
  %v1879 = vpack.c.b16 %v1836, %v1835
  %v1880 = vpack.c.b16 %v1838, %v1837
  %v1881 = vpack.c.b16 %v1840, %v1839
  %v1882 = vpack.c.b16 %v1842, %v1841
  %v1883 = vpack.c.b16 %v1844, %v1843
  %v1884 = vpack.c.b16 %v1846, %v1845
  %v1885 = vpack.c.b16 %v1848, %v1847
  %v1886 = vpack.c.b16 %v1850, %v1849
  %v1887 = vpack.c.b16 %v1852, %v1851
  %v1888 = vpack.c.b16 %v1854, %v1853
  %v1889 = vpack.c.b16 %v1856, %v1855
  %v1890 = vpack.c.b16 %v1858, %v1857
  %v1891 = vpack.c.b16 %v1860, %v1859
  %v1892 = vpack.c.b16 %v1862, %v1861
  %v1893 = vpack.c.b16 %v1864, %v1863
  %v1894 = vpack.c.b16 %v1866, %v1865
  %v1895 = vpack.c.b16 %v1868, %v1867
  %v1896 = vpack.c.b16 %v1870, %v1869
  %v1897 = vpack.c.b16 %v1872, %v1871
  %v1898 = vpack.c.b16 %v1874, %v1873
  %1923 = vmatprep.subr.bf16.mxu0 0
  %1924 = vmatpush1.bf16.msra.mxu0 %v1882
  %1925 = vmatprep.subr.bf16.mxu0 0
  %1926 = vmatpush1.bf16.msra.mxu0 %v1881
  %1927 = vmatprep.subr.bf16.mxu0 0
  %1928 = vmatpush1.bf16.msra.mxu0 %v1880
  %1929 = vmatprep.subr.bf16.mxu0 0
  %1930 = vmatpush1.bf16.msra.mxu0 %v1879
  %1931 = vmatprep.subr.bf16.mxu0 0
  %1932 = vmatpush1.bf16.msra.mxu0 %v1878
  %1933 = vmatprep.subr.bf16.mxu0 0
  %1934 = vmatpush1.bf16.msra.mxu0 %v1877
  %1935 = vmatprep.subr.bf16.mxu0 0
  %1936 = vmatpush1.bf16.msra.mxu0 %v1876
  %1937 = vmatprep.subr.bf16.mxu0 0
  %1938 = vmatpush1.bf16.msra.mxu0 %v1875
  %1939 = vmatprep.subr.bf16.mxu0 0
  %1940 = vmatpush2.bf16.msra.mxu0 %v1890
  %1941 = vmatprep.subr.bf16.mxu0 0
  %1942 = vmatpush2.bf16.msra.mxu0 %v1889
  %1943 = vmatprep.subr.bf16.mxu0 0
  %1944 = vmatpush2.bf16.msra.mxu0 %v1888
  %1945 = vmatprep.subr.bf16.mxu0 0
  %1946 = vmatpush2.bf16.msra.mxu0 %v1887
  %1947 = vmatprep.subr.bf16.mxu0 0
  %1948 = vmatpush2.bf16.msra.mxu0 %v1886
  %1949 = vmatprep.subr.bf16.mxu0 0
  %1950 = vmatpush2.bf16.msra.mxu0 %v1885
  %1951 = vmatprep.subr.bf16.mxu0 0
  %1952 = vmatpush2.bf16.msra.mxu0 %v1884
  %1953 = vmatprep.subr.bf16.mxu0 0
  %1954 = vmatpush2.bf16.msra.mxu0 %v1883
  %1955 = vmatprep.mubr.bf16.mxu0 %v1696
  %1956 = vmatmul.mubr.bf16.gmra.mxu0 %v1676
  %v1957 = vpop.f32.mrf.mxu0
  %v1958 = vadd.f32 %v1777, %v1957
  %v1959 = vpop.f32.mrf.mxu0
  %v1960 = vpop.f32.mrf.mxu0
  %v1961 = vadd.f32 %v1777, %v1960
  %v1962 = vpop.f32.mrf.mxu0
  %1963 = vmatprep.mubr.bf16.mxu0 %v1704
  %1964 = vmatmul.mubr.bf16.gmra.mxu0 %v1677
  %v1965 = vpop.f32.mrf.mxu0
  %v1966 = vadd.f32 %v1777, %v1965
  %v1967 = vpop.f32.mrf.mxu0
  %v1968 = vpop.f32.mrf.mxu0
  %v1969 = vadd.f32 %v1777, %v1968
  %v1970 = vpop.f32.mrf.mxu0
  %1971 = vmatprep.mubr.bf16.mxu0 %v1707
  %1972 = vmatmul.mubr.bf16.gmra.mxu0 %v1678
  %v1973 = vpop.f32.mrf.mxu0
  %v1974 = vadd.f32 %v1777, %v1973
  %v1975 = vpop.f32.mrf.mxu0
  %v1976 = vpop.f32.mrf.mxu0
  %v1977 = vpop.f32.mrf.mxu0
  %1978 = vdwg.mxu0
  %1979 = vmatprep.subr.bf16.mxu0 0
  %1980 = vmatpush1.bf16.msra.mxu0 %v1898
  %1981 = vmatprep.subr.bf16.mxu0 0
  %1982 = vmatpush1.bf16.msra.mxu0 %v1897
  %1983 = vmatprep.subr.bf16.mxu0 0
  %1984 = vmatpush1.bf16.msra.mxu0 %v1896
  %1985 = vmatprep.subr.bf16.mxu0 0
  %1986 = vmatpush1.bf16.msra.mxu0 %v1895
  %1987 = vmatprep.subr.bf16.mxu0 0
  %1988 = vmatpush1.bf16.msra.mxu0 %v1894
  %1989 = vmatprep.subr.bf16.mxu0 0
  %1990 = vmatpush1.bf16.msra.mxu0 %v1893
  %1991 = vmatprep.subr.bf16.mxu0 0
  %1992 = vmatpush1.bf16.msra.mxu0 %v1892
  %1993 = vmatprep.subr.bf16.mxu0 0
  %1994 = vmatpush1.bf16.msra.mxu0 %v1891
  %1995 = vmatprep.subr.bf16.mxu0 0
  %1996 = vmatpush2.bf16.msra.mxu0 0
  %1997 = vmatprep.subr.bf16.mxu0 0
  %1998 = vmatpush2.bf16.msra.mxu0 0
  %1999 = vmatprep.subr.bf16.mxu0 0
  %2000 = vmatpush2.bf16.msra.mxu0 0
  %2001 = vmatprep.subr.bf16.mxu0 0
  %2002 = vmatpush2.bf16.msra.mxu0 0
  %2003 = vmatprep.subr.bf16.mxu0 0
  %2004 = vmatpush2.bf16.msra.mxu0 0
  %2005 = vmatprep.subr.bf16.mxu0 0
  %2006 = vmatpush2.bf16.msra.mxu0 0
  %2007 = vmatprep.subr.bf16.mxu0 0
  %2008 = vmatpush2.bf16.msra.mxu0 0
  %2009 = vmatprep.subr.bf16.mxu0 0
  %2010 = vmatpush2.bf16.msra.mxu0 0
  %2011 = vmatprep.mubr.bf16.mxu0 0
  %2012 = vmatmul.mubr.bf16.gmra.mxu0 %v1716
  %v2013 = vpop.f32.mrf.mxu0
  %v2014 = vadd.f32 %v1958, %v2013
  %v2015 = vpop.f32.mrf.mxu0
  %v2016 = vpop.f32.mrf.mxu0
  %v2017 = vadd.f32 %v1961, %v2016
  %v2018 = vpop.f32.mrf.mxu0
  %2019 = vmatprep.mubr.bf16.mxu0 0
  %2020 = vmatmul.mubr.bf16.gmra.mxu0 %v1718
  %v2021 = vpop.f32.mrf.mxu0
  %v2022 = vadd.f32 %v1966, %v2021
  %v2023 = vpop.f32.mrf.mxu0
  %v2024 = vpop.f32.mrf.mxu0
  %v2025 = vadd.f32 %v1969, %v2024
  %v2026 = vpop.f32.mrf.mxu0
  %2027 = vmatprep.mubr.bf16.mxu0 0
  %2028 = vmatmul.mubr.bf16.gmra.mxu0 %v1717
  %v2029 = vpop.f32.mrf.mxu0
  %v2030 = vadd.f32 %v1974, %v2029
  %v2031 = vpop.f32.mrf.mxu0
  %v2032 = vpop.f32.mrf.mxu0
  %v2033 = vpop.f32.mrf.mxu0
  %2034 = vdwg.mxu0
  %v2035 = vmax.f32 %v2014, 0.0
  %v2036 = vmax.f32 %v2017, 0.0
  %v2037 = vmax.f32 %v2022, 0.0
  %v2038 = vmax.f32 %v2025, 0.0
  %v2039 = vmax.f32 %v2030, 0.0
  %v2040 = vmul.f32 %v2035, %v134
  %v2041 = vmul.f32 %v2036, %v135
  %v2042 = vmul.f32 %v2037, %v136
  %v2043 = vmul.f32 %v2038, %v137
  %v2044 = vmul.f32 %v2039, %v138
  %v2045 = vld [vmem:[#allocation3] sm:$0xf]
  %v2046 = vld [vmem:[#allocation3 + $0x4] sm:$0xf]
  %v2047 = vld [vmem:[#allocation3 + $0x8] sm:$0xf]
  %v2048 = vld [vmem:[#allocation3 + $0xc] sm:$0xf]
  %v2049 = vld [vmem:[#allocation3 + $0x10] sm:$0x1]
  %v2050 = vunpack.c.l.bf16 %v2045
  %v2051 = vunpack.c.l.bf16 %v2046
  %v2052 = vunpack.c.l.bf16 %v2047
  %v2053 = vunpack.c.l.bf16 %v2048
  %v2054 = vunpack.c.l.bf16 %v2049
  %v2055 = vadd.f32 %v2040, %v2050
  %v2056 = vadd.f32 %v2041, %v2051
  %v2057 = vadd.f32 %v2042, %v2052
  %v2058 = vadd.f32 %v2043, %v2053
  %v2059 = vadd.f32 %v2044, %v2054
  %v2060 = vpack.c.bf16 %v2056, %v2055
  %v2061 = vpack.c.bf16 %v2058, %v2057
  %v2062 = vpack.c.bf16 %v2059, %v2059
  %v2066 = vunpack.c.l.b16 %v2060
  %v2067 = vunpack.c.h.b16 %v2060
  %v2068 = vunpack.c.l.b16 %v2061
  %v2069 = vunpack.c.h.b16 %v2061
  %v2070 = vunpack.c.l.b16 %v2062
  %v2071 = vpack.c.b16 %v2066, %v2066
  %v2072 = vpack.c.b16 %v2067, %v2067
  %v2073 = vpack.c.b16 %v2068, %v2068
  %v2074 = vpack.c.b16 %v2069, %v2069
  %v2075 = vpack.c.b16 %v2070, %v2070
  %v2077 = vshrl.u32 %v2071, 16
  %v2079 = vrot.slane %v2077, 7
  %v2080 = vshll.u32 %v2071, 16
  %v2082 = vor.u32 %v2079, %v2080
  %v2083 = vrot.slane %v2079, 4
  %v2085 = vshrl.u32 %v2072, 16
  %v2087 = vrot.slane %v2085, 7
  %v2088 = vshll.u32 %v2072, 16
  %v2090 = vor.u32 %v2087, %v2088
  %v2091 = vsel %vm34, %v2083, %v2090
  %v2092 = vrot.slane %v2087, 4
  %v2094 = vshrl.u32 %v2073, 16
  %v2096 = vrot.slane %v2094, 7
  %v2097 = vshll.u32 %v2073, 16
  %v2099 = vor.u32 %v2096, %v2097
  %v2100 = vsel %vm34, %v2092, %v2099
  %v2101 = vrot.slane %v2096, 4
  %v2103 = vshrl.u32 %v2074, 16
  %v2105 = vrot.slane %v2103, 7
  %v2106 = vshll.u32 %v2074, 16
  %v2108 = vor.u32 %v2105, %v2106
  %v2109 = vsel %vm34, %v2101, %v2108
  %v2110 = vrot.slane %v2105, 4
  %v2112 = vshrl.u32 %v2075, 16
  %v2114 = vrot.slane %v2112, 7
  %v2115 = vshll.u32 %v2075, 16
  %v2117 = vor.u32 %v2114, %v2115
  %v2118 = vsel %vm34, %v2110, %v2117
  %v2124 = vsel %vm57, %v2082, %v1659
  %2125 = vst [vmem:[#allocation2] sm:$0xf] %v2124
  %2126 = vst [vmem:[#allocation2 + $0x4] sm:$0xf] %v2091
  %2127 = vst [vmem:[#allocation2 + $0x8] sm:$0xf] %v2100
  %2128 = vst [vmem:[#allocation2 + $0xc] sm:$0xf] %v2109
  %v2129 = vld [vmem:[#allocation2 + $0x10] sm:$0x3]
  %v2130 = vsel %vm109, %v2118, %v2129
  %2131 = vst [vmem:[#allocation2 + $0x10] sm:$0x3] %v2130
  %v2132 = vld [vmem:[#allocation2] sm:$0xf]
  %v2133 = vld [vmem:[#allocation2 + $0x4] sm:$0xf]
  %v2134 = vld [vmem:[#allocation2 + $0x8] sm:$0x1]
  %v2135 = vunpack.c.l.bf16 %v2132
  %v2136 = vunpack.c.l.bf16 %v2133
  %v2137 = vunpack.c.l.bf16 %v2134
  %2138 = vst [vmem:[%s3 - $0x1] sm:$0xfe] %v2135
  %2139 = vst [vmem:[%s3 + $0x7] sm:$0xff] %v2136
  %2140 = vst [vmem:[%s3 + $0xf] sm:$0x1] %v2137
  %v2141 = vld [vmem:[#allocation2 + $0x8] sm:$0xe]
  %v2142 = vld [vmem:[#allocation2 + $0xc] sm:$0xf]
  %v2143 = vld [vmem:[#allocation2 + $0x10] sm:$0x3]
  %v2144 = vunpack.c.l.bf16 %v2141
  %v2145 = vunpack.c.l.bf16 %v2142
  %v2146 = vunpack.c.l.bf16 %v2143
  %s2147 = scalar_lea.vmem %s3, 16
  %2148 = vst [vmem:[%s2147 - $0x3] sm:$0xf8] %v2144
  %2149 = vst [vmem:[%s2147 + $0x5] sm:$0xff] %v2145
  %2150 = vst [vmem:[%s2147 + $0xd] sm:$0x7] %v2146
  // Predicated region
  $region18: #{block_stack_forward.1} parent=0 // pred_check
    _
  $region19: #{block_stack_forward.1} parent=0 // pred_check_branch
    %2152 = sbr.rel (0) target = $region21
  $region20: #{block_stack_forward.1} parent=0 // pred_region
    _
  $region21: #{block_stack_forward.1} parent=0 // pred_fallthru
    _
  // Predicated region
  $region22: #{block_stack_forward.1} parent=0 // pred_check
    _
  $region23: #{block_stack_forward.1} parent=0 // pred_check_branch
    %2154 = sbr.rel (0) target = $region25
  $region24: #{block_stack_forward.1} parent=0 // pred_region
    _
  $region25: #{block_stack_forward.1} parent=0 // pred_fallthru
    _

</llo_original>
